<compile_context>
chip_gen: v6e
topology: v6e:2x2x1
jax: 0.10.0
libtpu: 0.0.40
codegen_flags: <defaults>
</compile_context>

<pallas_src>
from functools import partial

import jax
import jax.numpy as jnp
from jax import lax
from jax.experimental import pallas as pl
from jax.experimental.pallas import tpu as pltpu

LANE = 128


def _round_up(x, m):
    return (x + m - 1) // m * m


def temporal_block_kernel(xpad_ref, w1_ref, b1_ref, w2_ref, b2_ref,
                          wd_ref, bd_ref, out_ref, *,
                          TL, K, dilation, padding, has_downsample,
                          residual, fuse_downsample, compute_dtype):
    """One (batch element, time tile) per grid step.

    xpad_ref : (1, Lpad + 2*padding, Cin_p) compute_dtype -- whole left-padded
               sequence of this batch element (resident across the t axis).
    w1_ref   : (K, Cin_p, C1out) compute_dtype; C1out = Cout_p, or 2*Cout_p when
               the 1x1 downsample is fused into conv1's extra output columns.
    w2_ref   : (K, Cout_p, Cout_p) compute_dtype
    b*_ref   : (1, Cout_p) float32
    wd_ref   : (Cin_p, Cout_p) compute_dtype (unused when fused / no downsample)
    out_ref  : (1, TL, Cout_p) out dtype
    """
    t = pl.program_id(1)
    t0 = pl.multiple_of(t * TL, 8)
    rows1 = TL + padding                 # conv1 rows incl. causal halo for conv2

    # ---- conv1 (+ optionally fused 1x1 downsample) --------------------------
    # K accumulating MXU dots against per-tap weight slices (no im2col concat
    # slab -> no extra VMEM copy traffic; the kernel is data-movement bound).
    acc = jnp.dot(xpad_ref[0, pl.ds(t0, rows1), :], w1_ref[0],
                  preferred_element_type=jnp.float32)
    for k in range(1, K):
        acc = acc + jnp.dot(xpad_ref[0, pl.ds(t0 + k * dilation, rows1), :],
                            w1_ref[k], preferred_element_type=jnp.float32)

    if fuse_downsample:
        cout_p = acc.shape[-1] // 2
        h1 = acc[:, :cout_p]
        # wd lives only in the last tap's extra columns; the last tap reads the
        # unshifted input, so these columns hold the 1x1 downsample of x.
        res = acc[padding:padding + TL, cout_p:] + bd_ref[...]
    else:
        h1 = acc
        res = None

    h1 = jnp.maximum(h1 + b1_ref[...], 0.0)      # bias + ReLU (f32)
    if padding > 0:
        # Rows with global time < 0 are conv2's *zero* left padding, not conv1
        # applied to zeros (which would be relu(bias)).  Only tile t == 0 has
        # such rows; for t > 0 the predicate is all-true (a few vregs of VPU
        # selects per tile -- negligible next to the matmuls).
        r = lax.broadcasted_iota(jnp.int32, (rows1, 1), 0)
        h1 = jnp.where(r >= padding - t * TL, h1, 0.0)
    # NOTE: h1 rows for times >= L (right padding) are relu(b1), not zero; they
    # never reach a valid output because conv2 is strictly causal and the
    # wrapper slices the output back to length L.  Keep this invariant in mind
    # if tap offsets / stride / padding are ever changed.
    h1c = h1.astype(compute_dtype)

    # ---- conv2 on the in-register h1 (halo recomputed, no scratch) ----------
    acc2 = jnp.dot(h1c[0:TL], w2_ref[0], preferred_element_type=jnp.float32)
    for k in range(1, K):
        acc2 = acc2 + jnp.dot(h1c[k * dilation:k * dilation + TL], w2_ref[k],
                              preferred_element_type=jnp.float32)
    h2 = jnp.maximum(acc2 + b2_ref[...], 0.0)

    if residual:
        if res is None:
            x_tile = xpad_ref[0, pl.ds(t0 + 2 * padding, TL), :]   # unshifted x
            if has_downsample:
                res = jnp.dot(x_tile, wd_ref[...],
                              preferred_element_type=jnp.float32) + bd_ref[...]
            else:
                res = x_tile.astype(jnp.float32)
        out_ref[0] = jnp.maximum(h2 + res, 0.0).astype(out_ref.dtype)
    else:
        out_ref[0] = h2.astype(out_ref.dtype)


def temporal_block(x, params, *, kernel_size, dilation, padding, stride=1,
                   residual=True, compute_dtype=jnp.bfloat16, out_dtype=None,
                   time_tile=512, nlc_io=False, fuse_downsample=None):
    """TemporalBlock forward.

    x      : (N, Cin, L) PyTorch NCL layout (or (N, L, Cin) if nlc_io=True).
    params : (w1, b1, w2, b2, wd, bd); wd/bd may be None when Cin == Cout.
    Returns (N, Cout, L) (or (N, L, Cout) if nlc_io) in out_dtype
    (default compute_dtype, i.e. bf16 -- halves the HBM writeback; pass
    out_dtype=jnp.float32 for exact-f32 outputs).
    """
    # TODO(synk): stride != 1 and training-mode dropout are not implemented.
    assert stride == 1
    # "pad p both sides then Chomp1d(p)" == causal conv with left pad p; the
    # torch residual add only type-checks when p == dilation * (K - 1).
    assert padding == dilation * (kernel_size - 1)

    w1, b1, w2, b2, wd, bd = params
    if nlc_io:
        N, L, Cin = x.shape
        x_nlc = x
    else:
        N, Cin, L = x.shape
        x_nlc = jnp.transpose(x, (0, 2, 1))
    Cout = w1.shape[0]
    K = kernel_size
    has_downsample = wd is not None
    out_dtype = compute_dtype if out_dtype is None else out_dtype

    Cin_p = _round_up(Cin, LANE)
    Cout_p = _round_up(Cout, LANE)
    if fuse_downsample is None:
        # Fill the 256-wide MXU of v6e/v7x and drop the separate 1x1 matmul.
        # On v5e (128-wide MXU) prefer fuse_downsample=False.
        fuse_downsample = residual and has_downsample and Cout_p == LANE
    fuse_downsample = bool(fuse_downsample and residual and has_downsample)

    TL = _round_up(min(time_tile, L), 8)      # sublane-aligned time tile
    Lpad = _round_up(L, TL)
    nT = Lpad // TL
    halo = 2 * padding
    Lp2 = Lpad + halo

    # ---- plain-JAX glue: layout, lane/time padding, weight prep, casts ------
    cdt = compute_dtype
    xpad = jnp.pad(x_nlc.astype(cdt),
                   ((0, 0), (halo, Lpad - L), (0, Cin_p - Cin)))

    w1t = jnp.pad(jnp.transpose(w1, (2, 1, 0)),               # (K, Cin, Cout)
                  ((0, 0), (0, Cin_p - Cin), (0, Cout_p - Cout)))
    if fuse_downsample:
        wd_t = jnp.pad(jnp.transpose(wd[:, :, 0], (1, 0)),
                       ((0, Cin_p - Cin), (0, Cout_p - Cout)))  # (Cin_p, Cout_p)
        wres = jnp.zeros((K, Cin_p, Cout_p), w1t.dtype).at[K - 1].set(wd_t)
        w1t = jnp.concatenate([w1t, wres], axis=-1)            # (K, Cin_p, 2*Cout_p)
    w1p = w1t.astype(cdt)
    C1out = w1p.shape[-1]

    w2p = jnp.pad(jnp.transpose(w2, (2, 1, 0)),
                  ((0, 0), (0, Cout_p - Cout), (0, Cout_p - Cout))).astype(cdt)
    b1p = jnp.pad(b1, (0, Cout_p - Cout)).reshape(1, Cout_p).astype(jnp.float32)
    b2p = jnp.pad(b2, (0, Cout_p - Cout)).reshape(1, Cout_p).astype(jnp.float32)
    if has_downsample and not fuse_downsample:
        wdp = jnp.pad(jnp.transpose(wd[:, :, 0], (1, 0)),
                      ((0, Cin_p - Cin), (0, Cout_p - Cout))).astype(cdt)
    else:
        wdp = jnp.zeros((Cin_p, Cout_p), cdt)                  # dummy, unused
    if has_downsample:
        bdp = jnp.pad(bd, (0, Cout_p - Cout)).reshape(1, Cout_p).astype(jnp.float32)
    else:
        bdp = jnp.zeros((1, Cout_p), jnp.float32)

    kern = partial(temporal_block_kernel, TL=TL, K=K, dilation=dilation,
                   padding=padding, has_downsample=has_downsample,
                   residual=residual, fuse_downsample=fuse_downsample,
                   compute_dtype=cdt)

    # Advisory cost estimate (padded dims) for the XLA scheduler.
    cbytes = jnp.dtype(cdt).itemsize
    obytes = jnp.dtype(out_dtype).itemsize
    wbytes = (K * Cin_p * C1out + K * Cout_p * Cout_p + Cin_p * Cout_p) * cbytes
    flops = 2 * N * nT * (K * (TL + padding) * Cin_p * C1out
                          + K * TL * Cout_p * Cout_p
                          + (TL * Cin_p * Cout_p
                             if (residual and has_downsample and not fuse_downsample)
                             else 0))
    bytes_accessed = (N * Lp2 * Cin_p * cbytes + N * Lpad * Cout_p * obytes
                      + wbytes + 3 * Cout_p * 4)
    cost = pl.CostEstimate(flops=int(flops), transcendentals=0,
                           bytes_accessed=int(bytes_accessed))

    # Explicit VMEM budget (v5e's default scoped limit is only 16 MiB): worst
    # case = everything double-buffered, x2 headroom, capped at 128 MiB.
    vmem_need = (2 * Lp2 * Cin_p * cbytes + 2 * wbytes
                 + 2 * TL * Cout_p * obytes + 6 * 8 * Cout_p * 4)
    vmem_limit = int(min(128 * 1024 * 1024,
                         max(32 * 1024 * 1024, 2 * vmem_need + (4 << 20))))

    # Megacore: split the batch axis (splitting t would duplicate the resident
    # per-batch input DMA/VMEM on both cores); fall back to t when N == 1.
    dims = ("parallel", "parallel") if N == 1 else ("parallel", "arbitrary")

    def _run(single_buffer):
        # The resident input and the weights/biases have constant index maps
        # along the inner axis, so double-buffering them only doubles their
        # VMEM footprint; request single buffering where supported.
        kw = {"pipeline_mode": pl.Buffered(1)} if single_buffer else {}
        in_specs = [
            pl.BlockSpec((1, Lp2, Cin_p), lambda n, t: (n, 0, 0), **kw),
            pl.BlockSpec((K, Cin_p, C1out), lambda n, t: (0, 0, 0), **kw),
            pl.BlockSpec((1, Cout_p), lambda n, t: (0, 0), **kw),
            pl.BlockSpec((K, Cout_p, Cout_p), lambda n, t: (0, 0, 0), **kw),
            pl.BlockSpec((1, Cout_p), lambda n, t: (0, 0), **kw),
            pl.BlockSpec((Cin_p, Cout_p), lambda n, t: (0, 0), **kw),
            pl.BlockSpec((1, Cout_p), lambda n, t: (0, 0), **kw),
        ]
        return pl.pallas_call(
            kern,
            out_shape=jax.ShapeDtypeStruct((N, Lpad, Cout_p), out_dtype),
            grid=(N, nT),
            in_specs=in_specs,
            out_specs=pl.BlockSpec((1, TL, Cout_p), lambda n, t: (n, t, 0)),
            compiler_params=pltpu.CompilerParams(
                dimension_semantics=dims, vmem_limit_bytes=vmem_limit),
            cost_estimate=cost,
        )(xpad, w1p, b1p, w2p, b2p, wdp, bdp)

    try:
        out_nlc = _run(True)
    except Exception:
        # pl.Buffered(1) / pipeline_mode unsupported on this jax: fall back to
        # default (double) buffering.  (Fallback works for eager calls.)
        out_nlc = _run(False)

    out = out_nlc[:, :L, :Cout]                  # drop time / lane padding
    return out if nlc_io else jnp.transpose(out, (0, 2, 1))


# ---------------- pure-JAX reference (exact f32, for correctness) -----------
def _ref_temporal_block(x, params, *, kernel_size, dilation, padding,
                        residual=True):
    w1, b1, w2, b2, wd, bd = params
    hp = lax.Precision.HIGHEST

    def causal_conv(inp, w, b):
        y = lax.conv_general_dilated(
            inp, w, window_strides=(1,), padding=[(padding, padding)],
            rhs_dilation=(dilation,), dimension_numbers=("NCH", "OIH", "NCH"),
            precision=hp, preferred_element_type=jnp.float32)
        y = y[:, :, : y.shape[2] - padding]                    # Chomp1d
        return y + b[None, :, None]

    h1 = jax.nn.relu(causal_conv(x, w1, b1))
    h2 = jax.nn.relu(causal_conv(h1, w2, b2))
    if not residual:
        return h2
    if wd is not None:
        res = lax.conv_general_dilated(
            x, wd, window_strides=(1,), padding=[(0, 0)],
            dimension_numbers=("NCH", "OIH", "NCH"), precision=hp,
            preferred_element_type=jnp.float32) + bd[None, :, None]
    else:
        res = x
    return jax.nn.relu(h2 + res)


if __name__ == "__main__":
    # Small deterministic config (implied by TemporalBlock.__init__):
    N, Cin, Cout, L = 2, 4, 8, 16
    K, dilation = 3, 2
    padding = (K - 1) * dilation          # standard TCN causal padding = 4

    key = jax.random.PRNGKey(0)
    k_x, k_w1, k_b1, k_w2, k_b2, k_wd, k_bd = jax.random.split(key, 7)

    x = jax.random.normal(k_x, (N, Cin, L), jnp.float32)
    # init_weights(): conv weights ~ N(0, 0.01); small deterministic biases.
    w1 = 0.01 * jax.random.normal(k_w1, (Cout, Cin, K), jnp.float32)
    b1 = 0.05 * jax.random.normal(k_b1, (Cout,), jnp.float32)
    w2 = 0.01 * jax.random.normal(k_w2, (Cout, Cout, K), jnp.float32)
    b2 = 0.05 * jax.random.normal(k_b2, (Cout,), jnp.float32)
    wd = 0.01 * jax.random.normal(k_wd, (Cout, Cin, 1), jnp.float32)  # Cin != Cout
    bd = 0.05 * jax.random.normal(k_bd, (Cout,), jnp.float32)
    params = (w1, b1, w2, b2, wd, bd)

    ref = _ref_temporal_block(x, params, kernel_size=K, dilation=dilation,
                              padding=padding, residual=True)

    # Tight check: f32 MXU operands + f32 output (exercises the fused 1x1 path).
    out_f32 = temporal_block(x, params, kernel_size=K, dilation=dilation,
                             padding=padding, residual=True,
                             compute_dtype=jnp.float32, out_dtype=jnp.float32)
    out_f32 = jax.block_until_ready(out_f32)
    assert out_f32.shape == (N, Cout, L)
    err_f32 = float(jnp.max(jnp.abs(out_f32 - ref)))
    assert err_f32 < 1e-3, err_f32

    # Fast default path: bf16 MXU operands + bf16 output stores.
    out_bf16 = temporal_block(x, params, kernel_size=K, dilation=dilation,
                              padding=padding, residual=True)
    out_bf16 = jax.block_until_ready(out_bf16)
    assert out_bf16.shape == (N, Cout, L)
    err_bf16 = float(jnp.max(jnp.abs(out_bf16.astype(jnp.float32) - ref)))
    assert err_bf16 < 2e-2, err_bf16

    print("KERNEL_OK")
</pallas_src>

<mosaic_0001>
module attributes {stable_mosaic.version = 11 : i64} {
  func.func @temporal_block_kernel(%arg0: i32, %arg1: i32, %arg2: memref<1x24x128xf32, #tpu.memory_space<vmem>>, %arg3: memref<3x128x256xf32, #tpu.memory_space<vmem>>, %arg4: memref<1x128xf32, #tpu.memory_space<vmem>>, %arg5: memref<3x128x128xf32, #tpu.memory_space<vmem>>, %arg6: memref<1x128xf32, #tpu.memory_space<vmem>>, %arg7: memref<128x128xf32, #tpu.memory_space<vmem>>, %arg8: memref<1x128xf32, #tpu.memory_space<vmem>>, %arg9: memref<1x16x128xf32, #tpu.memory_space<vmem>>) attributes {dimension_semantics = [#tpu.dimension_semantics<parallel>, #tpu.dimension_semantics<arbitrary>], iteration_bounds = array<i64: 2, 1>, scalar_prefetch = 0 : i64, scratch_operands = 0 : i64, tpu.core_type = #tpu.core_type<tc>, window_params = [{pipeline_mode = #tpu.pipeline_mode<synchronous>, transform_indices = @transform_0, window_bounds = array<i64: 1, 24, 128>}, {pipeline_mode = #tpu.pipeline_mode<synchronous>, transform_indices = @transform_1, window_bounds = array<i64: 3, 128, 256>}, {pipeline_mode = #tpu.pipeline_mode<synchronous>, transform_indices = @transform_2, window_bounds = array<i64: 1, 128>}, {pipeline_mode = #tpu.pipeline_mode<synchronous>, transform_indices = @transform_3, window_bounds = array<i64: 3, 128, 128>}, {pipeline_mode = #tpu.pipeline_mode<synchronous>, transform_indices = @transform_4, window_bounds = array<i64: 1, 128>}, {pipeline_mode = #tpu.pipeline_mode<synchronous>, transform_indices = @transform_5, window_bounds = array<i64: 128, 128>}, {pipeline_mode = #tpu.pipeline_mode<synchronous>, transform_indices = @transform_6, window_bounds = array<i64: 1, 128>}, {transform_indices = @transform_7, window_bounds = array<i64: 1, 16, 128>}]} {
    %c16_i32 = arith.constant 16 : i32
    %0 = arith.muli %arg1, %c16_i32 : i32
    %1 = tpu.assume_multiple %0, 8 : i32
    %c0 = arith.constant 0 : index
    %2 = arith.index_cast %1 : i32 to index
    %c0_0 = arith.constant 0 : index
    %3 = vector.load %arg2[%c0, %2, %c0_0] : memref<1x24x128xf32, #tpu.memory_space<vmem>>, vector<1x20x128xf32>
    %4 = vector.shape_cast %3 : vector<1x20x128xf32> to vector<20x128xf32>
    %c0_1 = arith.constant 0 : index
    %c0_2 = arith.constant 0 : index
    %c0_3 = arith.constant 0 : index
    %5 = vector.load %arg3[%c0_1, %c0_2, %c0_3] : memref<3x128x256xf32, #tpu.memory_space<vmem>>, vector<1x128x256xf32>
    %6 = vector.shape_cast %5 : vector<1x128x256xf32> to vector<128x256xf32>
    %cst = arith.constant dense<0.000000e+00> : vector<20x256xf32>
    %7 = tpu.matmul %4, %6, %cst {dimension_numbers = #tpu.dot_dimension_numbers<[1], [0], [0], [1], [0, 0, 1, 1], [], []>} : vector<20x128xf32>, vector<128x256xf32>, vector<20x256xf32> -> vector<20x256xf32>
    %c2_i32 = arith.constant 2 : i32
    %8 = arith.addi %1, %c2_i32 : i32
    %c0_4 = arith.constant 0 : index
    %9 = arith.index_cast %8 : i32 to index
    %c0_5 = arith.constant 0 : index
    %10 = vector.load %arg2[%c0_4, %9, %c0_5] : memref<1x24x128xf32, #tpu.memory_space<vmem>>, vector<1x20x128xf32>
    %11 = vector.shape_cast %10 : vector<1x20x128xf32> to vector<20x128xf32>
    %c1 = arith.constant 1 : index
    %c0_6 = arith.constant 0 : index
    %c0_7 = arith.constant 0 : index
    %12 = vector.load %arg3[%c1, %c0_6, %c0_7] : memref<3x128x256xf32, #tpu.memory_space<vmem>>, vector<1x128x256xf32>
    %13 = vector.shape_cast %12 : vector<1x128x256xf32> to vector<128x256xf32>
    %cst_8 = arith.constant dense<0.000000e+00> : vector<20x256xf32>
    %14 = tpu.matmul %11, %13, %cst_8 {dimension_numbers = #tpu.dot_dimension_numbers<[1], [0], [0], [1], [0, 0, 1, 1], [], []>} : vector<20x128xf32>, vector<128x256xf32>, vector<20x256xf32> -> vector<20x256xf32>
    %15 = arith.addf %7, %14 : vector<20x256xf32>
    %c4_i32 = arith.constant 4 : i32
    %16 = arith.addi %1, %c4_i32 : i32
    %c0_9 = arith.constant 0 : index
    %17 = arith.index_cast %16 : i32 to index
    %c0_10 = arith.constant 0 : index
    %18 = vector.load %arg2[%c0_9, %17, %c0_10] : memref<1x24x128xf32, #tpu.memory_space<vmem>>, vector<1x20x128xf32>
    %19 = vector.shape_cast %18 : vector<1x20x128xf32> to vector<20x128xf32>
    %c2 = arith.constant 2 : index
    %c0_11 = arith.constant 0 : index
    %c0_12 = arith.constant 0 : index
    %20 = vector.load %arg3[%c2, %c0_11, %c0_12] : memref<3x128x256xf32, #tpu.memory_space<vmem>>, vector<1x128x256xf32>
    %21 = vector.shape_cast %20 : vector<1x128x256xf32> to vector<128x256xf32>
    %cst_13 = arith.constant dense<0.000000e+00> : vector<20x256xf32>
    %22 = tpu.matmul %19, %21, %cst_13 {dimension_numbers = #tpu.dot_dimension_numbers<[1], [0], [0], [1], [0, 0, 1, 1], [], []>} : vector<20x128xf32>, vector<128x256xf32>, vector<20x256xf32> -> vector<20x256xf32>
    %23 = arith.addf %15, %22 : vector<20x256xf32>
    %24 = vector.extract_strided_slice %23 {offsets = [0, 0], sizes = [20, 128], strides = [1, 1]} : vector<20x256xf32> to vector<20x128xf32>
    %25 = vector.extract_strided_slice %23 {offsets = [4, 128], sizes = [16, 128], strides = [1, 1]} : vector<20x256xf32> to vector<16x128xf32>
    %c0_14 = arith.constant 0 : index
    %c0_15 = arith.constant 0 : index
    %26 = vector.load %arg8[%c0_14, %c0_15] : memref<1x128xf32, #tpu.memory_space<vmem>>, vector<1x128xf32>
    %27 = vector.broadcast %26 : vector<1x128xf32> to vector<16x128xf32>
    %28 = arith.addf %25, %27 : vector<16x128xf32>
    %c0_16 = arith.constant 0 : index
    %c0_17 = arith.constant 0 : index
    %29 = vector.load %arg4[%c0_16, %c0_17] : memref<1x128xf32, #tpu.memory_space<vmem>>, vector<1x128xf32>
    %30 = vector.broadcast %29 : vector<1x128xf32> to vector<20x128xf32>
    %31 = arith.addf %24, %30 : vector<20x128xf32>
    %cst_18 = arith.constant 0.000000e+00 : f32
    %32 = vector.broadcast %cst_18 : f32 to vector<20x128xf32>
    %33 = arith.maximumf %31, %32 : vector<20x128xf32>
    %34 = tpu.iota {dimensions = array<i32: 0>} : vector<20x1xi32>
    %c16_i32_19 = arith.constant 16 : i32
    %35 = arith.muli %arg1, %c16_i32_19 : i32
    %c4_i32_20 = arith.constant 4 : i32
    %36 = arith.subi %c4_i32_20, %35 : i32
    %37 = vector.broadcast %36 : i32 to vector<20x1xi32>
    %38 = arith.cmpi sge, %34, %37 : vector<20x1xi32>
    %cst_21 = arith.constant 0.000000e+00 : f32
    %39 = vector.shape_cast %38 : vector<20x1xi1> to vector<20x1xi1>
    %40 = vector.broadcast %39 : vector<20x1xi1> to vector<20x128xi1>
    %41 = vector.broadcast %cst_21 : f32 to vector<20x128xf32>
    %42 = arith.select %40, %33, %41 : vector<20x128xi1>, vector<20x128xf32>
    %43 = vector.extract_strided_slice %42 {offsets = [0, 0], sizes = [16, 128], strides = [1, 1]} : vector<20x128xf32> to vector<16x128xf32>
    %c0_22 = arith.constant 0 : index
    %c0_23 = arith.constant 0 : index
    %c0_24 = arith.constant 0 : index
    %44 = vector.load %arg5[%c0_22, %c0_23, %c0_24] : memref<3x128x128xf32, #tpu.memory_space<vmem>>, vector<1x128x128xf32>
    %45 = vector.shape_cast %44 : vector<1x128x128xf32> to vector<128x128xf32>
    %cst_25 = arith.constant dense<0.000000e+00> : vector<16x128xf32>
    %46 = tpu.matmul %43, %45, %cst_25 {dimension_numbers = #tpu.dot_dimension_numbers<[1], [0], [0], [1], [0, 0, 1, 1], [], []>} : vector<16x128xf32>, vector<128x128xf32>, vector<16x128xf32> -> vector<16x128xf32>
    %47 = vector.extract_strided_slice %42 {offsets = [2, 0], sizes = [16, 128], strides = [1, 1]} : vector<20x128xf32> to vector<16x128xf32>
    %c1_26 = arith.constant 1 : index
    %c0_27 = arith.constant 0 : index
    %c0_28 = arith.constant 0 : index
    %48 = vector.load %arg5[%c1_26, %c0_27, %c0_28] : memref<3x128x128xf32, #tpu.memory_space<vmem>>, vector<1x128x128xf32>
    %49 = vector.shape_cast %48 : vector<1x128x128xf32> to vector<128x128xf32>
    %cst_29 = arith.constant dense<0.000000e+00> : vector<16x128xf32>
    %50 = tpu.matmul %47, %49, %cst_29 {dimension_numbers = #tpu.dot_dimension_numbers<[1], [0], [0], [1], [0, 0, 1, 1], [], []>} : vector<16x128xf32>, vector<128x128xf32>, vector<16x128xf32> -> vector<16x128xf32>
    %51 = arith.addf %46, %50 : vector<16x128xf32>
    %52 = vector.extract_strided_slice %42 {offsets = [4, 0], sizes = [16, 128], strides = [1, 1]} : vector<20x128xf32> to vector<16x128xf32>
    %c2_30 = arith.constant 2 : index
    %c0_31 = arith.constant 0 : index
    %c0_32 = arith.constant 0 : index
    %53 = vector.load %arg5[%c2_30, %c0_31, %c0_32] : memref<3x128x128xf32, #tpu.memory_space<vmem>>, vector<1x128x128xf32>
    %54 = vector.shape_cast %53 : vector<1x128x128xf32> to vector<128x128xf32>
    %cst_33 = arith.constant dense<0.000000e+00> : vector<16x128xf32>
    %55 = tpu.matmul %52, %54, %cst_33 {dimension_numbers = #tpu.dot_dimension_numbers<[1], [0], [0], [1], [0, 0, 1, 1], [], []>} : vector<16x128xf32>, vector<128x128xf32>, vector<16x128xf32> -> vector<16x128xf32>
    %56 = arith.addf %51, %55 : vector<16x128xf32>
    %c0_34 = arith.constant 0 : index
    %c0_35 = arith.constant 0 : index
    %57 = vector.load %arg6[%c0_34, %c0_35] : memref<1x128xf32, #tpu.memory_space<vmem>>, vector<1x128xf32>
    %58 = vector.broadcast %57 : vector<1x128xf32> to vector<16x128xf32>
    %59 = arith.addf %56, %58 : vector<16x128xf32>
    %cst_36 = arith.constant 0.000000e+00 : f32
    %60 = vector.broadcast %cst_36 : f32 to vector<16x128xf32>
    %61 = arith.maximumf %59, %60 : vector<16x128xf32>
    %62 = arith.addf %61, %28 : vector<16x128xf32>
    %cst_37 = arith.constant 0.000000e+00 : f32
    %63 = vector.broadcast %cst_37 : f32 to vector<16x128xf32>
    %64 = arith.maximumf %62, %63 : vector<16x128xf32>
    %c0_38 = arith.constant 0 : index
    %c0_39 = arith.constant 0 : index
    %c0_40 = arith.constant 0 : index
    %65 = vector.load %arg9[%c0_38, %c0_39, %c0_40] : memref<1x16x128xf32, #tpu.memory_space<vmem>>, vector<1x16x128xf32>
    %66 = vector.shape_cast %65 : vector<1x16x128xf32> to vector<16x128xf32>
    %67 = vector.shape_cast %64 : vector<16x128xf32> to vector<1x16x128xf32>
    tpu.vector_store %arg9[%c0_38, %c0_39, %c0_40], %67 {strides = array<i32>} : memref<1x16x128xf32, #tpu.memory_space<vmem>>, vector<1x16x128xf32>,
    return
  }
  func.func @transform_0(%arg0: i32, %arg1: i32) -> (i32, i32, i32) {
    %c0_i32 = arith.constant 0 : i32
    %c0_i32_0 = arith.constant 0 : i32
    %c0_i32_1 = arith.constant 0 : i32
    return %arg0, %c0_i32, %c0_i32_0 : i32, i32, i32
  }
  func.func @transform_1(%arg0: i32, %arg1: i32) -> (i32, i32, i32) {
    %c0_i32 = arith.constant 0 : i32
    %c0_i32_0 = arith.constant 0 : i32
    %c0_i32_1 = arith.constant 0 : i32
    %c0_i32_2 = arith.constant 0 : i32
    return %c0_i32, %c0_i32_0, %c0_i32_1 : i32, i32, i32
  }
  func.func @transform_2(%arg0: i32, %arg1: i32) -> (i32, i32) {
    %c0_i32 = arith.constant 0 : i32
    %c0_i32_0 = arith.constant 0 : i32
    %c0_i32_1 = arith.constant 0 : i32
    return %c0_i32, %c0_i32_0 : i32, i32
  }
  func.func @transform_3(%arg0: i32, %arg1: i32) -> (i32, i32, i32) {
    %c0_i32 = arith.constant 0 : i32
    %c0_i32_0 = arith.constant 0 : i32
    %c0_i32_1 = arith.constant 0 : i32
    %c0_i32_2 = arith.constant 0 : i32
    return %c0_i32, %c0_i32_0, %c0_i32_1 : i32, i32, i32
  }
  func.func @transform_4(%arg0: i32, %arg1: i32) -> (i32, i32) {
    %c0_i32 = arith.constant 0 : i32
    %c0_i32_0 = arith.constant 0 : i32
    %c0_i32_1 = arith.constant 0 : i32
    return %c0_i32, %c0_i32_0 : i32, i32
  }
  func.func @transform_5(%arg0: i32, %arg1: i32) -> (i32, i32) {
    %c0_i32 = arith.constant 0 : i32
    %c0_i32_0 = arith.constant 0 : i32
    %c0_i32_1 = arith.constant 0 : i32
    return %c0_i32, %c0_i32_0 : i32, i32
  }
  func.func @transform_6(%arg0: i32, %arg1: i32) -> (i32, i32) {
    %c0_i32 = arith.constant 0 : i32
    %c0_i32_0 = arith.constant 0 : i32
    %c0_i32_1 = arith.constant 0 : i32
    return %c0_i32, %c0_i32_0 : i32, i32
  }
  func.func @transform_7(%arg0: i32, %arg1: i32) -> (i32, i32, i32) {
    %c0_i32 = arith.constant 0 : i32
    %c0_i32_0 = arith.constant 0 : i32
    return %arg0, %arg1, %c0_i32 : i32, i32, i32
  }
}

module attributes {stable_mosaic.version = 11 : i64} {
  func.func @temporal_block_kernel(%arg0: i32, %arg1: i32, %arg2: memref<1x24x128xf32, #tpu.memory_space<vmem>>, %arg3: memref<3x128x256xf32, #tpu.memory_space<vmem>>, %arg4: memref<1x128xf32, #tpu.memory_space<vmem>>, %arg5: memref<3x128x128xf32, #tpu.memory_space<vmem>>, %arg6: memref<1x128xf32, #tpu.memory_space<vmem>>, %arg7: memref<128x128xf32, #tpu.memory_space<vmem>>, %arg8: memref<1x128xf32, #tpu.memory_space<vmem>>, %arg9: memref<1x16x128xf32, #tpu.memory_space<vmem>>) attributes {dimension_semantics = [#tpu.dimension_semantics<parallel>, #tpu.dimension_semantics<arbitrary>], iteration_bounds = array<i64: 2, 1>, scalar_prefetch = 0 : i64, scratch_operands = 0 : i64, tpu.core_type = #tpu.core_type<tc>, window_params = [{transform_indices = @transform_0, window_bounds = array<i64: 1, 24, 128>}, {pipeline_mode = #tpu.pipeline_mode<synchronous>, transform_indices = @transform_1, window_bounds = array<i64: 3, 128, 256>}, {pipeline_mode = #tpu.pipeline_mode<synchronous>, transform_indices = @transform_2, window_bounds = array<i64: 1, 128>}, {pipeline_mode = #tpu.pipeline_mode<synchronous>, transform_indices = @transform_3, window_bounds = array<i64: 3, 128, 128>}, {pipeline_mode = #tpu.pipeline_mode<synchronous>, transform_indices = @transform_4, window_bounds = array<i64: 1, 128>}, {pipeline_mode = #tpu.pipeline_mode<synchronous>, transform_indices = @transform_5, window_bounds = array<i64: 128, 128>}, {pipeline_mode = #tpu.pipeline_mode<synchronous>, transform_indices = @transform_6, window_bounds = array<i64: 1, 128>}, {transform_indices = @transform_7, window_bounds = array<i64: 1, 16, 128>}]} {
    %c16_i32 = arith.constant 16 : i32
    %0 = arith.muli %arg1, %c16_i32 : i32
    %1 = tpu.assume_multiple %0, 8 : i32
    %c0 = arith.constant 0 : index
    %2 = arith.index_cast %1 : i32 to index
    %c0_0 = arith.constant 0 : index
    %3 = vector.load %arg2[%c0, %2, %c0_0] : memref<1x24x128xf32, #tpu.memory_space<vmem>>, vector<1x20x128xf32>
    %4 = vector.shape_cast %3 : vector<1x20x128xf32> to vector<20x128xf32>
    %c0_1 = arith.constant 0 : index
    %c0_2 = arith.constant 0 : index
    %c0_3 = arith.constant 0 : index
    %5 = vector.load %arg3[%c0_1, %c0_2, %c0_3] : memref<3x128x256xf32, #tpu.memory_space<vmem>>, vector<1x128x256xf32>
    %6 = vector.shape_cast %5 : vector<1x128x256xf32> to vector<128x256xf32>
    %cst = arith.constant dense<0.000000e+00> : vector<20x256xf32>
    %7 = tpu.matmul %4, %6, %cst {dimension_numbers = #tpu.dot_dimension_numbers<[1], [0], [0], [1], [0, 0, 1, 1], [], []>} : vector<20x128xf32>, vector<128x256xf32>, vector<20x256xf32> -> vector<20x256xf32>
    %c2_i32 = arith.constant 2 : i32
    %8 = arith.addi %1, %c2_i32 : i32
    %c0_4 = arith.constant 0 : index
    %9 = arith.index_cast %8 : i32 to index
    %c0_5 = arith.constant 0 : index
    %10 = vector.load %arg2[%c0_4, %9, %c0_5] : memref<1x24x128xf32, #tpu.memory_space<vmem>>, vector<1x20x128xf32>
    %11 = vector.shape_cast %10 : vector<1x20x128xf32> to vector<20x128xf32>
    %c1 = arith.constant 1 : index
    %c0_6 = arith.constant 0 : index
    %c0_7 = arith.constant 0 : index
    %12 = vector.load %arg3[%c1, %c0_6, %c0_7] : memref<3x128x256xf32, #tpu.memory_space<vmem>>, vector<1x128x256xf32>
    %13 = vector.shape_cast %12 : vector<1x128x256xf32> to vector<128x256xf32>
    %cst_8 = arith.constant dense<0.000000e+00> : vector<20x256xf32>
    %14 = tpu.matmul %11, %13, %cst_8 {dimension_numbers = #tpu.dot_dimension_numbers<[1], [0], [0], [1], [0, 0, 1, 1], [], []>} : vector<20x128xf32>, vector<128x256xf32>, vector<20x256xf32> -> vector<20x256xf32>
    %15 = arith.addf %7, %14 : vector<20x256xf32>
    %c4_i32 = arith.constant 4 : i32
    %16 = arith.addi %1, %c4_i32 : i32
    %c0_9 = arith.constant 0 : index
    %17 = arith.index_cast %16 : i32 to index
    %c0_10 = arith.constant 0 : index
    %18 = vector.load %arg2[%c0_9, %17, %c0_10] : memref<1x24x128xf32, #tpu.memory_space<vmem>>, vector<1x20x128xf32>
    %19 = vector.shape_cast %18 : vector<1x20x128xf32> to vector<20x128xf32>
    %c2 = arith.constant 2 : index
    %c0_11 = arith.constant 0 : index
    %c0_12 = arith.constant 0 : index
    %20 = vector.load %arg3[%c2, %c0_11, %c0_12] : memref<3x128x256xf32, #tpu.memory_space<vmem>>, vector<1x128x256xf32>
    %21 = vector.shape_cast %20 : vector<1x128x256xf32> to vector<128x256xf32>
    %cst_13 = arith.constant dense<0.000000e+00> : vector<20x256xf32>
    %22 = tpu.matmul %19, %21, %cst_13 {dimension_numbers = #tpu.dot_dimension_numbers<[1], [0], [0], [1], [0, 0, 1, 1], [], []>} : vector<20x128xf32>, vector<128x256xf32>, vector<20x256xf32> -> vector<20x256xf32>
    %23 = arith.addf %15, %22 : vector<20x256xf32>
    %24 = vector.extract_strided_slice %23 {offsets = [0, 0], sizes = [20, 128], strides = [1, 1]} : vector<20x256xf32> to vector<20x128xf32>
    %25 = vector.extract_strided_slice %23 {offsets = [4, 128], sizes = [16, 128], strides = [1, 1]} : vector<20x256xf32> to vector<16x128xf32>
    %c0_14 = arith.constant 0 : index
    %c0_15 = arith.constant 0 : index
    %26 = vector.load %arg8[%c0_14, %c0_15] : memref<1x128xf32, #tpu.memory_space<vmem>>, vector<1x128xf32>
    %27 = vector.broadcast %26 : vector<1x128xf32> to vector<16x128xf32>
    %28 = arith.addf %25, %27 : vector<16x128xf32>
    %c0_16 = arith.constant 0 : index
    %c0_17 = arith.constant 0 : index
    %29 = vector.load %arg4[%c0_16, %c0_17] : memref<1x128xf32, #tpu.memory_space<vmem>>, vector<1x128xf32>
    %30 = vector.broadcast %29 : vector<1x128xf32> to vector<20x128xf32>
    %31 = arith.addf %24, %30 : vector<20x128xf32>
    %cst_18 = arith.constant 0.000000e+00 : f32
    %32 = vector.broadcast %cst_18 : f32 to vector<20x128xf32>
    %33 = arith.maximumf %31, %32 : vector<20x128xf32>
    %34 = tpu.iota {dimensions = array<i32: 0>} : vector<20x1xi32>
    %c16_i32_19 = arith.constant 16 : i32
    %35 = arith.muli %arg1, %c16_i32_19 : i32
    %c4_i32_20 = arith.constant 4 : i32
    %36 = arith.subi %c4_i32_20, %35 : i32
    %37 = vector.broadcast %36 : i32 to vector<20x1xi32>
    %38 = arith.cmpi sge, %34, %37 : vector<20x1xi32>
    %cst_21 = arith.constant 0.000000e+00 : f32
    %39 = vector.shape_cast %38 : vector<20x1xi1> to vector<20x1xi1>
    %40 = vector.broadcast %39 : vector<20x1xi1> to vector<20x128xi1>
    %41 = vector.broadcast %cst_21 : f32 to vector<20x128xf32>
    %42 = arith.select %40, %33, %41 : vector<20x128xi1>, vector<20x128xf32>
    %43 = vector.extract_strided_slice %42 {offsets = [0, 0], sizes = [16, 128], strides = [1, 1]} : vector<20x128xf32> to vector<16x128xf32>
    %c0_22 = arith.constant 0 : index
    %c0_23 = arith.constant 0 : index
    %c0_24 = arith.constant 0 : index
    %44 = vector.load %arg5[%c0_22, %c0_23, %c0_24] : memref<3x128x128xf32, #tpu.memory_space<vmem>>, vector<1x128x128xf32>
    %45 = vector.shape_cast %44 : vector<1x128x128xf32> to vector<128x128xf32>
    %cst_25 = arith.constant dense<0.000000e+00> : vector<16x128xf32>
    %46 = tpu.matmul %43, %45, %cst_25 {dimension_numbers = #tpu.dot_dimension_numbers<[1], [0], [0], [1], [0, 0, 1, 1], [], []>} : vector<16x128xf32>, vector<128x128xf32>, vector<16x128xf32> -> vector<16x128xf32>
    %47 = vector.extract_strided_slice %42 {offsets = [2, 0], sizes = [16, 128], strides = [1, 1]} : vector<20x128xf32> to vector<16x128xf32>
    %c1_26 = arith.constant 1 : index
    %c0_27 = arith.constant 0 : index
    %c0_28 = arith.constant 0 : index
    %48 = vector.load %arg5[%c1_26, %c0_27, %c0_28] : memref<3x128x128xf32, #tpu.memory_space<vmem>>, vector<1x128x128xf32>
    %49 = vector.shape_cast %48 : vector<1x128x128xf32> to vector<128x128xf32>
    %cst_29 = arith.constant dense<0.000000e+00> : vector<16x128xf32>
    %50 = tpu.matmul %47, %49, %cst_29 {dimension_numbers = #tpu.dot_dimension_numbers<[1], [0], [0], [1], [0, 0, 1, 1], [], []>} : vector<16x128xf32>, vector<128x128xf32>, vector<16x128xf32> -> vector<16x128xf32>
    %51 = arith.addf %46, %50 : vector<16x128xf32>
    %52 = vector.extract_strided_slice %42 {offsets = [4, 0], sizes = [16, 128], strides = [1, 1]} : vector<20x128xf32> to vector<16x128xf32>
    %c2_30 = arith.constant 2 : index
    %c0_31 = arith.constant 0 : index
    %c0_32 = arith.constant 0 : index
    %53 = vector.load %arg5[%c2_30, %c0_31, %c0_32] : memref<3x128x128xf32, #tpu.memory_space<vmem>>, vector<1x128x128xf32>
    %54 = vector.shape_cast %53 : vector<1x128x128xf32> to vector<128x128xf32>
    %cst_33 = arith.constant dense<0.000000e+00> : vector<16x128xf32>
    %55 = tpu.matmul %52, %54, %cst_33 {dimension_numbers = #tpu.dot_dimension_numbers<[1], [0], [0], [1], [0, 0, 1, 1], [], []>} : vector<16x128xf32>, vector<128x128xf32>, vector<16x128xf32> -> vector<16x128xf32>
    %56 = arith.addf %51, %55 : vector<16x128xf32>
    %c0_34 = arith.constant 0 : index
    %c0_35 = arith.constant 0 : index
    %57 = vector.load %arg6[%c0_34, %c0_35] : memref<1x128xf32, #tpu.memory_space<vmem>>, vector<1x128xf32>
    %58 = vector.broadcast %57 : vector<1x128xf32> to vector<16x128xf32>
    %59 = arith.addf %56, %58 : vector<16x128xf32>
    %cst_36 = arith.constant 0.000000e+00 : f32
    %60 = vector.broadcast %cst_36 : f32 to vector<16x128xf32>
    %61 = arith.maximumf %59, %60 : vector<16x128xf32>
    %62 = arith.addf %61, %28 : vector<16x128xf32>
    %cst_37 = arith.constant 0.000000e+00 : f32
    %63 = vector.broadcast %cst_37 : f32 to vector<16x128xf32>
    %64 = arith.maximumf %62, %63 : vector<16x128xf32>
    %c0_38 = arith.constant 0 : index
    %c0_39 = arith.constant 0 : index
    %c0_40 = arith.constant 0 : index
    %65 = vector.load %arg9[%c0_38, %c0_39, %c0_40] : memref<1x16x128xf32, #tpu.memory_space<vmem>>, vector<1x16x128xf32>
    %66 = vector.shape_cast %65 : vector<1x16x128xf32> to vector<16x128xf32>
    %67 = vector.shape_cast %64 : vector<16x128xf32> to vector<1x16x128xf32>
    tpu.vector_store %arg9[%c0_38, %c0_39, %c0_40], %67 {strides = array<i32>} : memref<1x16x128xf32, #tpu.memory_space<vmem>>, vector<1x16x128xf32>,
    return
  }
  func.func @transform_0(%arg0: i32, %arg1: i32) -> (i32, i32, i32) {
    %c0_i32 = arith.constant 0 : i32
    %c0_i32_0 = arith.constant 0 : i32
    %c0_i32_1 = arith.constant 0 : i32
    return %arg0, %c0_i32, %c0_i32_0 : i32, i32, i32
  }
  func.func @transform_1(%arg0: i32, %arg1: i32) -> (i32, i32, i32) {
    %c0_i32 = arith.constant 0 : i32
    %c0_i32_0 = arith.constant 0 : i32
    %c0_i32_1 = arith.constant 0 : i32
    %c0_i32_2 = arith.constant 0 : i32
    return %c0_i32, %c0_i32_0, %c0_i32_1 : i32, i32, i32
  }
  func.func @transform_2(%arg0: i32, %arg1: i32) -> (i32, i32) {
    %c0_i32 = arith.constant 0 : i32
    %c0_i32_0 = arith.constant 0 : i32
    %c0_i32_1 = arith.constant 0 : i32
    return %c0_i32, %c0_i32_0 : i32, i32
  }
  func.func @transform_3(%arg0: i32, %arg1: i32) -> (i32, i32, i32) {
    %c0_i32 = arith.constant 0 : i32
    %c0_i32_0 = arith.constant 0 : i32
    %c0_i32_1 = arith.constant 0 : i32
    %c0_i32_2 = arith.constant 0 : i32
    return %c0_i32, %c0_i32_0, %c0_i32_1 : i32, i32, i32
  }
  func.func @transform_4(%arg0: i32, %arg1: i32) -> (i32, i32) {
    %c0_i32 = arith.constant 0 : i32
    %c0_i32_0 = arith.constant 0 : i32
    %c0_i32_1 = arith.constant 0 : i32
    return %c0_i32, %c0_i32_0 : i32, i32
  }
  func.func @transform_5(%arg0: i32, %arg1: i32) -> (i32, i32) {
    %c0_i32 = arith.constant 0 : i32
    %c0_i32_0 = arith.constant 0 : i32
    %c0_i32_1 = arith.constant 0 : i32
    return %c0_i32, %c0_i32_0 : i32, i32
  }
  func.func @transform_6(%arg0: i32, %arg1: i32) -> (i32, i32) {
    %c0_i32 = arith.constant 0 : i32
    %c0_i32_0 = arith.constant 0 : i32
    %c0_i32_1 = arith.constant 0 : i32
    return %c0_i32, %c0_i32_0 : i32, i32
  }
  func.func @transform_7(%arg0: i32, %arg1: i32) -> (i32, i32, i32) {
    %c0_i32 = arith.constant 0 : i32
    %c0_i32_0 = arith.constant 0 : i32
    return %arg0, %arg1, %c0_i32 : i32, i32, i32
  }
}

</mosaic_0001>

<llo_original>
// kernel: tpu_custom_call.1
$region0: #{tpu_custom_call.1}
  #allocation0 [shape = 'u32[]', space=smem, size = 0x4, offset = 0x4, fixed_abs, tag = 'smem constant byte address 0x4 - core index']
  #allocation1 [shape = 'u32[144,128]{1,0:T(1,128)}', space=vmem, size = 0x12000, scoped, tag = 'internal scratch']
  %s0 = inlined_call_operand.hbm [shape: f32[2,24,128], index: 0, kind: input, shape index: {}]
  %s1 = inlined_call_operand.hbm [shape: f32[3,128,256], index: 1, kind: input, shape index: {}]
  %s2 = inlined_call_operand.vmem [shape: f32[1,128], index: 2, kind: input, shape index: {}]
  %s3 = inlined_call_operand.hbm [shape: f32[3,128,128], index: 3, kind: input, shape index: {}]
  %s4 = inlined_call_operand.vmem [shape: f32[1,128], index: 4, kind: input, shape index: {}]
  %s5 = inlined_call_operand.hbm [shape: f32[128,128], index: 5, kind: input, shape index: {}]
  %s6 = inlined_call_operand.vmem [shape: f32[1,128], index: 6, kind: input, shape index: {}]
  %s7 = inlined_call_operand.hbm [shape: f32[2,16,128], index: 7, kind: output, shape index: {}]
  %s8 = sld [smem:[#allocation0]]
  $region77: #{tpu_custom_call.1} parent=0
    _
  %s10 = ssub.s32 1, %s8
  %s11 = scalar_select 0, %s10, %s8
  $region1: #{tpu_custom_call.1} parent=0
    #allocation2 [shape = 'u8[12288]{0}', space=vmem, size = 0x3000, scoped, tag = 'input window, operand 0, single buffered']
    #allocation3 [shape = 's32[2]{0}', space=sflag, size = 0x8, scoped, tag = 'scoped memory for tpu_custom_call.1']
    #allocation4 [shape = 's32[2]{0}', space=sflag, size = 0x8, scoped, tag = 'scoped memory for tpu_custom_call.1']
    #allocation5 [shape = 'u8[393216]{0}', space=vmem, size = 0x60000, scoped, tag = 'input window, operand 1, single buffered']
    #allocation6 [shape = 's32[1]{0}', space=sflag, size = 0x4, scoped, tag = 'scoped memory for tpu_custom_call.1']
    #allocation7 [shape = 'u8[196608]{0}', space=vmem, size = 0x30000, scoped, tag = 'input window, operand 3, single buffered']
    #allocation8 [shape = 'u8[65536]{0}', space=vmem, size = 0x10000, scoped, tag = 'input window, operand 5, single buffered']
    #allocation9 [shape = 's32[1]{0}', space=sflag, size = 0x4, scoped, tag = 'scoped memory for tpu_custom_call.1']
    #allocation10 [shape = 'u8[16384]{0}', space=vmem, size = 0x4000, scoped, tag = 'output window, operand 0']
    %12 = vsyncpa [#allocation3], 0
    %13 = vsyncpa [#allocation6], 0
    %14 = vsyncpa [#allocation9], 0
    %15 = vsyncpa [#allocation4], 0
    %s16 = scalar_lea.sflag [#allocation4], 1
    %17 = vsyncpa %s16, 0
    loop: start=0, step=1, limit=4
    $region2: #{tpu_custom_call.1} parent=1 // loop_pre_header
      _
    $region3: #{tpu_custom_call.1} parent=1 // loop_header
      %s19 = sphi 0, %s23
      %p20 = scmp.ge.s32.totalorder %s19, 4
      %s26 = sphi 0, %s38
      %s27 = sphi 0, %s34
      %s28 = sphi 0, %s26
      %s29 = sphi 0, %s27
      %s30 = sphi 0, %s28
      %s31 = sphi 0, %s29
      %s41 = sphi 0, %s43
      %s44 = sphi 0, %s41
      %s45 = sphi 0, %s44
      %s61 = sphi 0, %s45
      %s65 = sphi 0, %s65
      %s67 = sphi 0, %s65
      %s68 = sphi 0, %s67
      %s82 = sphi 0, %s68
      %s86 = sphi 0, %s86
      %s88 = sphi 0, %s86
      %s89 = sphi 0, %s88
      %s103 = sphi 0, %s89
      %s107 = sphi 0, %s107
      %s109 = sphi 0, %s107
      %s110 = sphi 0, %s109
      %s124 = sphi 0, %s110
      %s128 = sphi 0, %s128
      %s130 = sphi 0, %s128
      %s131 = sphi 0, %s130
      %s145 = sphi 0, %s131
      %s149 = sphi 0, %s149
      %s151 = sphi 0, %s149
      %s152 = sphi 0, %s151
      %s166 = sphi 0, %s152
      %s170 = sphi 0, %s170
      %s172 = sphi 0, %s170
      %s173 = sphi 0, %s172
      %s187 = sphi 0, %s173
      %s195 = sphi 0, %s197
      %s198 = sphi 0, %s195
      %s199 = sphi 0, %s198
      %s215 = sphi 0, %s199
    $region4: #{tpu_custom_call.1} parent=1 // loop_header_branch
      %22 = sbr.rel (%p20) target = $region8
    $region5: #{tpu_custom_call.1} parent=1 // loop_body
      %s24 = ssub.s32 %s19, 1
      %s25 = ssub.s32 %s19, 2
      %s32 = sadd.s32 1, %s27
      %p33 = scmp.ge.s32.totalorder %s32, 1
      %s34 = scalar_select %p33, 0, %s32
      %s35 = sadd.s32 1, %s26
      %s36 = scalar_select %p33, %s35, %s26
      %p37 = scmp.ge.s32.totalorder %s36, 2
      %s38 = scalar_select %p37, 0, %s36
      %s39 = ssub.s32 %s26, %s38
      %p40 = scmp.eq.s32.totalorder %s39, 0
      %s42 = sadd.s32 %s41, 1
      %s43 = scalar_select %p40, %s41, %s42
      %p46 = pneg %p40
      %p47 = scmp.eq.s32.totalorder %s19, 1
      %p48 = por %p46, %p47
      %p49 = scmp.ne.s32.totalorder %s41, %s44
      %p50 = scmp.eq.s32.totalorder %s19, 0
      %p51 = por %p49, %p50
      %p52 = scmp.ne.s32.totalorder %s41, %s44
      %p53 = scmp.eq.s32.totalorder %s24, 1
      %p54 = por %p52, %p53
      %p55 = scmp.ne.s32.totalorder %s44, %s45
      %p56 = scmp.eq.s32.totalorder %s24, 0
      %p57 = por %p55, %p56
      %p58 = scmp.ne.s32.totalorder %s44, %s45
      %p59 = scmp.eq.s32.totalorder %s25, 1
      %p60 = por %p58, %p59
      %p62 = scmp.ne.s32.totalorder %s45, %s61
      %p63 = scmp.eq.s32.totalorder %s25, 0
      %p64 = por %p62, %p63
      %s66 = sadd.s32 %s65, 1
      %p69 = scmp.eq.s32.totalorder %s19, 1
      %p70 = scmp.ne.s32.totalorder %s65, %s67
      %p71 = scmp.eq.s32.totalorder %s19, 0
      %p72 = por %p70, %p71
      %p73 = scmp.ne.s32.totalorder %s65, %s67
      %p74 = scmp.eq.s32.totalorder %s24, 1
      %p75 = por %p73, %p74
      %p76 = scmp.ne.s32.totalorder %s67, %s68
      %p77 = scmp.eq.s32.totalorder %s24, 0
      %p78 = por %p76, %p77
      %p79 = scmp.ne.s32.totalorder %s67, %s68
      %p80 = scmp.eq.s32.totalorder %s25, 1
      %p81 = por %p79, %p80
      %p83 = scmp.ne.s32.totalorder %s68, %s82
      %p84 = scmp.eq.s32.totalorder %s25, 0
      %p85 = por %p83, %p84
      %s87 = sadd.s32 %s86, 1
      %p90 = scmp.eq.s32.totalorder %s19, 1
      %p91 = scmp.ne.s32.totalorder %s86, %s88
      %p92 = scmp.eq.s32.totalorder %s19, 0
      %p93 = por %p91, %p92
      %p94 = scmp.ne.s32.totalorder %s86, %s88
      %p95 = scmp.eq.s32.totalorder %s24, 1
      %p96 = por %p94, %p95
      %p97 = scmp.ne.s32.totalorder %s88, %s89
      %p98 = scmp.eq.s32.totalorder %s24, 0
      %p99 = por %p97, %p98
      %p100 = scmp.ne.s32.totalorder %s88, %s89
      %p101 = scmp.eq.s32.totalorder %s25, 1
      %p102 = por %p100, %p101
      %p104 = scmp.ne.s32.totalorder %s89, %s103
      %p105 = scmp.eq.s32.totalorder %s25, 0
      %p106 = por %p104, %p105
      %s108 = sadd.s32 %s107, 1
      %p111 = scmp.eq.s32.totalorder %s19, 1
      %p112 = scmp.ne.s32.totalorder %s107, %s109
      %p113 = scmp.eq.s32.totalorder %s19, 0
      %p114 = por %p112, %p113
      %p115 = scmp.ne.s32.totalorder %s107, %s109
      %p116 = scmp.eq.s32.totalorder %s24, 1
      %p117 = por %p115, %p116
      %p118 = scmp.ne.s32.totalorder %s109, %s110
      %p119 = scmp.eq.s32.totalorder %s24, 0
      %p120 = por %p118, %p119
      %p121 = scmp.ne.s32.totalorder %s109, %s110
      %p122 = scmp.eq.s32.totalorder %s25, 1
      %p123 = por %p121, %p122
      %p125 = scmp.ne.s32.totalorder %s110, %s124
      %p126 = scmp.eq.s32.totalorder %s25, 0
      %p127 = por %p125, %p126
      %s129 = sadd.s32 %s128, 1
      %p132 = scmp.eq.s32.totalorder %s19, 1
      %p133 = scmp.ne.s32.totalorder %s128, %s130
      %p134 = scmp.eq.s32.totalorder %s19, 0
      %p135 = por %p133, %p134
      %p136 = scmp.ne.s32.totalorder %s128, %s130
      %p137 = scmp.eq.s32.totalorder %s24, 1
      %p138 = por %p136, %p137
      %p139 = scmp.ne.s32.totalorder %s130, %s131
      %p140 = scmp.eq.s32.totalorder %s24, 0
      %p141 = por %p139, %p140
      %p142 = scmp.ne.s32.totalorder %s130, %s131
      %p143 = scmp.eq.s32.totalorder %s25, 1
      %p144 = por %p142, %p143
      %p146 = scmp.ne.s32.totalorder %s131, %s145
      %p147 = scmp.eq.s32.totalorder %s25, 0
      %p148 = por %p146, %p147
      %s150 = sadd.s32 %s149, 1
      %p153 = scmp.eq.s32.totalorder %s19, 1
      %p154 = scmp.ne.s32.totalorder %s149, %s151
      %p155 = scmp.eq.s32.totalorder %s19, 0
      %p156 = por %p154, %p155
      %p157 = scmp.ne.s32.totalorder %s149, %s151
      %p158 = scmp.eq.s32.totalorder %s24, 1
      %p159 = por %p157, %p158
      %p160 = scmp.ne.s32.totalorder %s151, %s152
      %p161 = scmp.eq.s32.totalorder %s24, 0
      %p162 = por %p160, %p161
      %p163 = scmp.ne.s32.totalorder %s151, %s152
      %p164 = scmp.eq.s32.totalorder %s25, 1
      %p165 = por %p163, %p164
      %p167 = scmp.ne.s32.totalorder %s152, %s166
      %p168 = scmp.eq.s32.totalorder %s25, 0
      %p169 = por %p167, %p168
      %s171 = sadd.s32 %s170, 1
      %p174 = scmp.eq.s32.totalorder %s19, 1
      %p175 = scmp.ne.s32.totalorder %s170, %s172
      %p176 = scmp.eq.s32.totalorder %s19, 0
      %p177 = por %p175, %p176
      %p178 = scmp.ne.s32.totalorder %s170, %s172
      %p179 = scmp.eq.s32.totalorder %s24, 1
      %p180 = por %p178, %p179
      %p181 = scmp.ne.s32.totalorder %s172, %s173
      %p182 = scmp.eq.s32.totalorder %s24, 0
      %p183 = por %p181, %p182
      %p184 = scmp.ne.s32.totalorder %s172, %s173
      %p185 = scmp.eq.s32.totalorder %s25, 1
      %p186 = por %p184, %p185
      %p188 = scmp.ne.s32.totalorder %s173, %s187
      %p189 = scmp.eq.s32.totalorder %s25, 0
      %p190 = por %p188, %p189
      %s191 = ssub.s32 %s26, %s38
      %s192 = ssub.s32 %s27, %s34
      %s193 = sor.u32 %s191, %s192
      %p194 = scmp.eq.s32.totalorder %s193, 0
      %s196 = sadd.s32 %s195, 1
      %s197 = scalar_select %p194, %s195, %s196
      %p200 = pneg %p194
      %p201 = scmp.eq.s32.totalorder %s19, 1
      %p202 = por %p200, %p201
      %p203 = scmp.ne.s32.totalorder %s195, %s198
      %p204 = scmp.eq.s32.totalorder %s19, 0
      %p205 = por %p203, %p204
      %p206 = scmp.ne.s32.totalorder %s195, %s198
      %p207 = scmp.eq.s32.totalorder %s24, 1
      %p208 = por %p206, %p207
      %p209 = scmp.ne.s32.totalorder %s198, %s199
      %p210 = scmp.eq.s32.totalorder %s24, 0
      %p211 = por %p209, %p210
      %p212 = scmp.ne.s32.totalorder %s198, %s199
      %p213 = scmp.eq.s32.totalorder %s25, 1
      %p214 = por %p212, %p213
      %p216 = scmp.ne.s32.totalorder %s199, %s215
      %p217 = scmp.eq.s32.totalorder %s25, 0
      %p218 = por %p216, %p217
      %p219 = scmp.le.s32.totalorder 1, %s19
      %p220 = scmp.lt.s32.totalorder %s19, 3
      %p221 = pnand %p219, %p220
      %p222 = pneg %p221
      // Predicated region
      $region9: #{tpu_custom_call.1} parent=5 // pred_check
        _
      $region10: #{tpu_custom_call.1} parent=5 // pred_check_branch
        %224 = sbr.rel (%p221) target = $region12
      $region11: #{tpu_custom_call.1} parent=5 // pred_region
        %s225 = ssub.s32 %s19, 1
        // Predicated region
        $region13: #{tpu_custom_call.1} parent=11 // pred_check
          %p226 = pneg %p57
        $region14: #{tpu_custom_call.1} parent=11 // pred_check_branch
          %228 = sbr.rel (%p226) target = $region16
        $region15: #{tpu_custom_call.1} parent=11 // pred_region
          %s230 = ssub.s32 384, 384
          %231 = vsyncadd [#allocation3], %s230
          %s232 = smul.addr %s28, 3
          %s233 = smul.addr %s232, 128
          %s234 = scalar_lea.hbm %s0, %s233
          %s235 = sshll.u32 [#allocation2], 4
          %s236 = int_to_ptr.vmem [resolvable:$true] %s235
          %241 = dma.hbm_to_vmem [thread:$0]  %s234, 384, %s236, [#allocation3], 128, 128, 8
        $region16: #{tpu_custom_call.1} parent=11 // pred_fallthru
          _
        // Predicated region
        $region17: #{tpu_custom_call.1} parent=11 // pred_check
          %p242 = pneg %p78
        $region18: #{tpu_custom_call.1} parent=11 // pred_check_branch
          %244 = sbr.rel (%p242) target = $region20
        $region19: #{tpu_custom_call.1} parent=11 // pred_region
          %s246 = ssub.s32 12288, 12288
          %247 = vsyncadd [#allocation6], %s246
          %s248 = sshll.u32 [#allocation5], 4
          %s249 = int_to_ptr.vmem [resolvable:$true] %s248
          %254 = dma.hbm_to_vmem [thread:$0]  %s1, 12288, %s249, [#allocation6], 256, 256, 16
        $region20: #{tpu_custom_call.1} parent=11 // pred_fallthru
          _
        // Predicated region
        $region21: #{tpu_custom_call.1} parent=11 // pred_check
          %p255 = pneg %p99
        $region22: #{tpu_custom_call.1} parent=11 // pred_check_branch
          %257 = sbr.rel (%p255) target = $region24
        $region23: #{tpu_custom_call.1} parent=11 // pred_region
          _
        $region24: #{tpu_custom_call.1} parent=11 // pred_fallthru
          _
        // Predicated region
        $region25: #{tpu_custom_call.1} parent=11 // pred_check
          %p258 = pneg %p120
        $region26: #{tpu_custom_call.1} parent=11 // pred_check_branch
          %260 = sbr.rel (%p258) target = $region28
        $region27: #{tpu_custom_call.1} parent=11 // pred_region
          %s262 = ssub.s32 6144, 6144
          %263 = vsyncadd [#allocation6], %s262
          %s264 = sshll.u32 [#allocation7], 4
          %s265 = int_to_ptr.vmem [resolvable:$true] %s264
          %270 = dma.hbm_to_vmem [thread:$0]  %s3, 6144, %s265, [#allocation6], 128, 128, 8
        $region28: #{tpu_custom_call.1} parent=11 // pred_fallthru
          _
        // Predicated region
        $region29: #{tpu_custom_call.1} parent=11 // pred_check
          %p271 = pneg %p141
        $region30: #{tpu_custom_call.1} parent=11 // pred_check_branch
          %273 = sbr.rel (%p271) target = $region32
        $region31: #{tpu_custom_call.1} parent=11 // pred_region
          _
        $region32: #{tpu_custom_call.1} parent=11 // pred_fallthru
          _
        // Predicated region
        $region33: #{tpu_custom_call.1} parent=11 // pred_check
          %p274 = pneg %p162
        $region34: #{tpu_custom_call.1} parent=11 // pred_check_branch
          %276 = sbr.rel (%p274) target = $region36
        $region35: #{tpu_custom_call.1} parent=11 // pred_region
          %s278 = ssub.s32 2048, 2048
          %279 = vsyncadd [#allocation9], %s278
          %s280 = sshll.u32 [#allocation8], 4
          %s281 = int_to_ptr.vmem [resolvable:$true] %s280
          %286 = dma.hbm_to_vmem [thread:$0]  %s5, 2048, %s281, [#allocation9], 128, 128, 8
        $region36: #{tpu_custom_call.1} parent=11 // pred_fallthru
          _
        // Predicated region
        $region37: #{tpu_custom_call.1} parent=11 // pred_check
          %p287 = pneg %p183
        $region38: #{tpu_custom_call.1} parent=11 // pred_check_branch
          %289 = sbr.rel (%p287) target = $region40
        $region39: #{tpu_custom_call.1} parent=11 // pred_region
          _
        $region40: #{tpu_custom_call.1} parent=11 // pred_fallthru
          _
      $region12: #{tpu_custom_call.1} parent=5 // pred_fallthru
        _
      %p290 = scmp.lt.s32.totalorder %s19, 2
      // Predicated region
      $region41: #{tpu_custom_call.1} parent=5 // pred_check
        %p291 = pneg %p290
      $region42: #{tpu_custom_call.1} parent=5 // pred_check_branch
        %293 = sbr.rel (%p291) target = $region44
      $region43: #{tpu_custom_call.1} parent=5 // pred_region
        _
      $region44: #{tpu_custom_call.1} parent=5 // pred_fallthru
        _
      %p294 = scmp.le.s32.totalorder 1, %s19
      %p295 = scmp.lt.s32.totalorder %s19, 3
      %p296 = pnand %p294, %p295
      %p297 = pneg %p296
      // Predicated region
      $region45: #{tpu_custom_call.1} parent=5 // pred_check
        _
      $region46: #{tpu_custom_call.1} parent=5 // pred_check_branch
        %299 = sbr.rel (%p296) target = $region48
      $region47: #{tpu_custom_call.1} parent=5 // pred_region
        %s300 = ssub.s32 %s19, 1
        // Predicated region
        $region49: #{tpu_custom_call.1} parent=47 // pred_check
          %p301 = pneg %p57
        $region50: #{tpu_custom_call.1} parent=47 // pred_check_branch
          %303 = sbr.rel (%p301) target = $region52
        $region51: #{tpu_custom_call.1} parent=47 // pred_region
          %304 = dma.done [#allocation3], 384
        $region52: #{tpu_custom_call.1} parent=47 // pred_fallthru
          _
        // Predicated region
        $region53: #{tpu_custom_call.1} parent=47 // pred_check
          %p305 = pneg %p78
        $region54: #{tpu_custom_call.1} parent=47 // pred_check_branch
          %307 = sbr.rel (%p305) target = $region56
        $region55: #{tpu_custom_call.1} parent=47 // pred_region
          %308 = dma.done [#allocation6], 12288
        $region56: #{tpu_custom_call.1} parent=47 // pred_fallthru
          _
        // Predicated region
        $region57: #{tpu_custom_call.1} parent=47 // pred_check
          %p309 = pneg %p120
        $region58: #{tpu_custom_call.1} parent=47 // pred_check_branch
          %311 = sbr.rel (%p309) target = $region60
        $region59: #{tpu_custom_call.1} parent=47 // pred_region
          %312 = dma.done [#allocation6], 6144
        $region60: #{tpu_custom_call.1} parent=47 // pred_fallthru
          _
        // Predicated region
        $region61: #{tpu_custom_call.1} parent=47 // pred_check
          %p313 = pneg %p162
        $region62: #{tpu_custom_call.1} parent=47 // pred_check_branch
          %315 = sbr.rel (%p313) target = $region64
        $region63: #{tpu_custom_call.1} parent=47 // pred_region
          %316 = dma.done [#allocation9], 2048
        $region64: #{tpu_custom_call.1} parent=47 // pred_fallthru
          _
        %p317 = pneg %p57
        %p318 = pneg %p54
        %p319 = pneg %p78
        %p320 = pneg %p75
        %p321 = pneg %p99
        %p322 = pneg %p96
        %p323 = pneg %p120
        %p324 = pneg %p117
        %p325 = pneg %p141
        %p326 = pneg %p138
        %p327 = pneg %p162
        %p328 = pneg %p159
        %p329 = pneg %p183
        %p330 = pneg %p180
        %p331 = pneg %p211
        %p332 = pneg %p208
        %s333 = sand.u32 %s198, 1
        %s334 = scalar_lea.sflag [#allocation4], %s333
        %s335 = sand.u32 %s198, 1
        %s336 = smul.addr %s335, 16
        %s337 = scalar_lea.vmem [#allocation10], %s336
        %s338 = smul.u32 2, %s29
        %s339 = smul.u32 %s29, 16
        %s340 = scalar_lea.vmem [#allocation2], %s339
        %v341 = vld [vmem:[%s340] sm:$0xff]
        %v342 = vld [vmem:[%s340 + $0x8] sm:$0xff]
        %v343 = vld [vmem:[%s340 + $0x10] sm:$0xf]
        %v344 = vld [vmem:[#allocation5] sm:$0xff]
        %v345 = vld [vmem:[#allocation5 + $0x8] sm:$0xff]
        %v346 = vld [vmem:[#allocation5 + $0x10] sm:$0xff]
        %v347 = vld [vmem:[#allocation5 + $0x18] sm:$0xff]
        %v348 = vld [vmem:[#allocation5 + $0x20] sm:$0xff]
        %v349 = vld [vmem:[#allocation5 + $0x28] sm:$0xff]
        %v350 = vld [vmem:[#allocation5 + $0x30] sm:$0xff]
        %v351 = vld [vmem:[#allocation5 + $0x38] sm:$0xff]
        %v352 = vld [vmem:[#allocation5 + $0x40] sm:$0xff]
        %v353 = vld [vmem:[#allocation5 + $0x48] sm:$0xff]
        %v354 = vld [vmem:[#allocation5 + $0x50] sm:$0xff]
        %v355 = vld [vmem:[#allocation5 + $0x58] sm:$0xff]
        %v356 = vld [vmem:[#allocation5 + $0x60] sm:$0xff]
        %v357 = vld [vmem:[#allocation5 + $0x68] sm:$0xff]
        %v358 = vld [vmem:[#allocation5 + $0x70] sm:$0xff]
        %v359 = vld [vmem:[#allocation5 + $0x78] sm:$0xff]
        %v360 = vld [vmem:[#allocation5 + $0x80] sm:$0xff]
        %v361 = vld [vmem:[#allocation5 + $0x88] sm:$0xff]
        %v362 = vld [vmem:[#allocation5 + $0x90] sm:$0xff]
        %v363 = vld [vmem:[#allocation5 + $0x98] sm:$0xff]
        %v364 = vld [vmem:[#allocation5 + $0xa0] sm:$0xff]
        %v365 = vld [vmem:[#allocation5 + $0xa8] sm:$0xff]
        %v366 = vld [vmem:[#allocation5 + $0xb0] sm:$0xff]
        %v367 = vld [vmem:[#allocation5 + $0xb8] sm:$0xff]
        %v368 = vld [vmem:[#allocation5 + $0xc0] sm:$0xff]
        %v369 = vld [vmem:[#allocation5 + $0xc8] sm:$0xff]
        %v370 = vld [vmem:[#allocation5 + $0xd0] sm:$0xff]
        %v371 = vld [vmem:[#allocation5 + $0xd8] sm:$0xff]
        %v372 = vld [vmem:[#allocation5 + $0xe0] sm:$0xff]
        %v373 = vld [vmem:[#allocation5 + $0xe8] sm:$0xff]
        %v374 = vld [vmem:[#allocation5 + $0xf0] sm:$0xff]
        %v375 = vld [vmem:[#allocation5 + $0xf8] sm:$0xff]
        %s376 = sadd.s32 %s339, 2
        %s377 = scalar_lea.vmem [#allocation2], %s376
        %v378 = vld [vmem:[%s377] sm:$0xff]
        %v379 = vld [vmem:[%s377 + $0x8] sm:$0xff]
        %v380 = vld [vmem:[%s377 + $0x10] sm:$0xf]
        %s381 = scalar_lea.vmem [#allocation5], 256
        %v382 = vld [vmem:[%s381] sm:$0xff]
        %v383 = vld [vmem:[%s381 + $0x8] sm:$0xff]
        %v384 = vld [vmem:[%s381 + $0x10] sm:$0xff]
        %v385 = vld [vmem:[%s381 + $0x18] sm:$0xff]
        %v386 = vld [vmem:[%s381 + $0x20] sm:$0xff]
        %v387 = vld [vmem:[%s381 + $0x28] sm:$0xff]
        %v388 = vld [vmem:[%s381 + $0x30] sm:$0xff]
        %v389 = vld [vmem:[%s381 + $0x38] sm:$0xff]
        %v390 = vld [vmem:[%s381 + $0x40] sm:$0xff]
        %v391 = vld [vmem:[%s381 + $0x48] sm:$0xff]
        %v392 = vld [vmem:[%s381 + $0x50] sm:$0xff]
        %v393 = vld [vmem:[%s381 + $0x58] sm:$0xff]
        %v394 = vld [vmem:[%s381 + $0x60] sm:$0xff]
        %v395 = vld [vmem:[%s381 + $0x68] sm:$0xff]
        %v396 = vld [vmem:[%s381 + $0x70] sm:$0xff]
        %v397 = vld [vmem:[%s381 + $0x78] sm:$0xff]
        %v398 = vld [vmem:[%s381 + $0x80] sm:$0xff]
        %v399 = vld [vmem:[%s381 + $0x88] sm:$0xff]
        %v400 = vld [vmem:[%s381 + $0x90] sm:$0xff]
        %v401 = vld [vmem:[%s381 + $0x98] sm:$0xff]
        %v402 = vld [vmem:[%s381 + $0xa0] sm:$0xff]
        %v403 = vld [vmem:[%s381 + $0xa8] sm:$0xff]
        %v404 = vld [vmem:[%s381 + $0xb0] sm:$0xff]
        %v405 = vld [vmem:[%s381 + $0xb8] sm:$0xff]
        %v406 = vld [vmem:[%s381 + $0xc0] sm:$0xff]
        %v407 = vld [vmem:[%s381 + $0xc8] sm:$0xff]
        %v408 = vld [vmem:[%s381 + $0xd0] sm:$0xff]
        %v409 = vld [vmem:[%s381 + $0xd8] sm:$0xff]
        %v410 = vld [vmem:[%s381 + $0xe0] sm:$0xff]
        %v411 = vld [vmem:[%s381 + $0xe8] sm:$0xff]
        %v412 = vld [vmem:[%s381 + $0xf0] sm:$0xff]
        %v413 = vld [vmem:[%s381 + $0xf8] sm:$0xff]
        %414 = vmatprep.subr.mxu0 %v413
        %415 = vmatpush1.msra.mxu0 %v412
        %416 = vmatprep.subr.mxu0 %v411
        %417 = vmatpush1.msra.mxu0 %v410
        %418 = vmatprep.subr.mxu0 %v409
        %419 = vmatpush1.msra.mxu0 %v408
        %420 = vmatprep.subr.mxu0 %v407
        %421 = vmatpush1.msra.mxu0 %v406
        %422 = vmatprep.subr.mxu0 %v405
        %423 = vmatpush1.msra.mxu0 %v404
        %424 = vmatprep.subr.mxu0 %v403
        %425 = vmatpush1.msra.mxu0 %v402
        %426 = vmatprep.subr.mxu0 %v401
        %427 = vmatpush1.msra.mxu0 %v400
        %428 = vmatprep.subr.mxu0 %v399
        %429 = vmatpush1.msra.mxu0 %v398
        %430 = vmatprep.subr.mxu0 %v397
        %431 = vmatpush1.msra.mxu0 %v396
        %432 = vmatprep.subr.mxu0 %v395
        %433 = vmatpush1.msra.mxu0 %v394
        %434 = vmatprep.subr.mxu0 %v393
        %435 = vmatpush1.msra.mxu0 %v392
        %436 = vmatprep.subr.mxu0 %v391
        %437 = vmatpush1.msra.mxu0 %v390
        %438 = vmatprep.subr.mxu0 %v389
        %439 = vmatpush1.msra.mxu0 %v388
        %440 = vmatprep.subr.mxu0 %v387
        %441 = vmatpush1.msra.mxu0 %v386
        %442 = vmatprep.subr.mxu0 %v385
        %443 = vmatpush1.msra.mxu0 %v384
        %444 = vmatprep.subr.mxu0 %v383
        %445 = vmatpush1.msra.mxu0 %v382
        %446 = vmatprep.subr.mxu0 0.0
        %447 = vmatpush2.msra.mxu0 0.0
        %448 = vmatprep.subr.mxu0 0.0
        %449 = vmatpush2.msra.mxu0 0.0
        %450 = vmatprep.subr.mxu0 0.0
        %451 = vmatpush2.msra.mxu0 0.0
        %452 = vmatprep.subr.mxu0 0.0
        %453 = vmatpush2.msra.mxu0 0.0
        %454 = vmatprep.subr.mxu0 0.0
        %455 = vmatpush2.msra.mxu0 0.0
        %456 = vmatprep.subr.mxu0 0.0
        %457 = vmatpush2.msra.mxu0 0.0
        %458 = vmatprep.subr.mxu0 0.0
        %459 = vmatpush2.msra.mxu0 0.0
        %460 = vmatprep.subr.mxu0 0.0
        %461 = vmatpush2.msra.mxu0 0.0
        %462 = vmatprep.subr.mxu0 0.0
        %463 = vmatpush2.msra.mxu0 0.0
        %464 = vmatprep.subr.mxu0 0.0
        %465 = vmatpush2.msra.mxu0 0.0
        %466 = vmatprep.subr.mxu0 0.0
        %467 = vmatpush2.msra.mxu0 0.0
        %468 = vmatprep.subr.mxu0 0.0
        %469 = vmatpush2.msra.mxu0 0.0
        %470 = vmatprep.subr.mxu0 0.0
        %471 = vmatpush2.msra.mxu0 0.0
        %472 = vmatprep.subr.mxu0 0.0
        %473 = vmatpush2.msra.mxu0 0.0
        %474 = vmatprep.subr.mxu0 0.0
        %475 = vmatpush2.msra.mxu0 0.0
        %476 = vmatprep.subr.mxu0 0.0
        %477 = vmatpush2.msra.mxu0 0.0
        %478 = vmatprep.mubr.f32.mxu0 0.0
        %479 = vmatmul.mubr.f32.gmra.mxu0 %v378
        %v480 = vpop.f32.mrf.mxu0
        %v481 = vadd.f32 0.0, %v480
        %v482 = vpop.f32.mrf.mxu0
        %v483 = vadd.f32 0.0, %v482
        %484 = vmatprep.mubr.f32.mxu0 0.0
        %485 = vmatmul.mubr.f32.gmra.mxu0 %v379
        %v486 = vpop.f32.mrf.mxu0
        %v487 = vadd.f32 0.0, %v486
        %v488 = vpop.f32.mrf.mxu0
        %v489 = vadd.f32 0.0, %v488
        %490 = vmatprep.mubr.f32.mxu0 0.0
        %491 = vmatmul.mubr.f32.gmra.mxu0 %v380
        %v492 = vpop.f32.mrf.mxu0
        %v493 = vadd.f32 0.0, %v492
        %v494 = vpop.f32.mrf.mxu0
        %v495 = vadd.f32 0.0, %v494
        %496 = vdwg.mxu0
        %497 = vmatprep.subr.mxu0 %v375
        %498 = vmatpush1.msra.mxu0 %v374
        %499 = vmatprep.subr.mxu0 %v373
        %500 = vmatpush1.msra.mxu0 %v372
        %501 = vmatprep.subr.mxu0 %v371
        %502 = vmatpush1.msra.mxu0 %v370
        %503 = vmatprep.subr.mxu0 %v369
        %504 = vmatpush1.msra.mxu0 %v368
        %505 = vmatprep.subr.mxu0 %v367
        %506 = vmatpush1.msra.mxu0 %v366
        %507 = vmatprep.subr.mxu0 %v365
        %508 = vmatpush1.msra.mxu0 %v364
        %509 = vmatprep.subr.mxu0 %v363
        %510 = vmatpush1.msra.mxu0 %v362
        %511 = vmatprep.subr.mxu0 %v361
        %512 = vmatpush1.msra.mxu0 %v360
        %513 = vmatprep.subr.mxu0 %v359
        %514 = vmatpush1.msra.mxu0 %v358
        %515 = vmatprep.subr.mxu0 %v357
        %516 = vmatpush1.msra.mxu0 %v356
        %517 = vmatprep.subr.mxu0 %v355
        %518 = vmatpush1.msra.mxu0 %v354
        %519 = vmatprep.subr.mxu0 %v353
        %520 = vmatpush1.msra.mxu0 %v352
        %521 = vmatprep.subr.mxu0 %v351
        %522 = vmatpush1.msra.mxu0 %v350
        %523 = vmatprep.subr.mxu0 %v349
        %524 = vmatpush1.msra.mxu0 %v348
        %525 = vmatprep.subr.mxu0 %v347
        %526 = vmatpush1.msra.mxu0 %v346
        %527 = vmatprep.subr.mxu0 %v345
        %528 = vmatpush1.msra.mxu0 %v344
        %529 = vmatprep.subr.mxu0 0.0
        %530 = vmatpush2.msra.mxu0 0.0
        %531 = vmatprep.subr.mxu0 0.0
        %532 = vmatpush2.msra.mxu0 0.0
        %533 = vmatprep.subr.mxu0 0.0
        %534 = vmatpush2.msra.mxu0 0.0
        %535 = vmatprep.subr.mxu0 0.0
        %536 = vmatpush2.msra.mxu0 0.0
        %537 = vmatprep.subr.mxu0 0.0
        %538 = vmatpush2.msra.mxu0 0.0
        %539 = vmatprep.subr.mxu0 0.0
        %540 = vmatpush2.msra.mxu0 0.0
        %541 = vmatprep.subr.mxu0 0.0
        %542 = vmatpush2.msra.mxu0 0.0
        %543 = vmatprep.subr.mxu0 0.0
        %544 = vmatpush2.msra.mxu0 0.0
        %545 = vmatprep.subr.mxu0 0.0
        %546 = vmatpush2.msra.mxu0 0.0
        %547 = vmatprep.subr.mxu0 0.0
        %548 = vmatpush2.msra.mxu0 0.0
        %549 = vmatprep.subr.mxu0 0.0
        %550 = vmatpush2.msra.mxu0 0.0
        %551 = vmatprep.subr.mxu0 0.0
        %552 = vmatpush2.msra.mxu0 0.0
        %553 = vmatprep.subr.mxu0 0.0
        %554 = vmatpush2.msra.mxu0 0.0
        %555 = vmatprep.subr.mxu0 0.0
        %556 = vmatpush2.msra.mxu0 0.0
        %557 = vmatprep.subr.mxu0 0.0
        %558 = vmatpush2.msra.mxu0 0.0
        %559 = vmatprep.subr.mxu0 0.0
        %560 = vmatpush2.msra.mxu0 0.0
        %561 = vmatprep.mubr.f32.mxu0 0.0
        %562 = vmatmul.mubr.f32.gmra.mxu0 %v341
        %v563 = vpop.f32.mrf.mxu0
        %v564 = vadd.f32 %v481, %v563
        %v565 = vpop.f32.mrf.mxu0
        %v566 = vadd.f32 %v483, %v565
        %567 = vmatprep.mubr.f32.mxu0 0.0
        %568 = vmatmul.mubr.f32.gmra.mxu0 %v342
        %v569 = vpop.f32.mrf.mxu0
        %v570 = vadd.f32 %v487, %v569
        %v571 = vpop.f32.mrf.mxu0
        %v572 = vadd.f32 %v489, %v571
        %573 = vmatprep.mubr.f32.mxu0 0.0
        %574 = vmatmul.mubr.f32.gmra.mxu0 %v343
        %v575 = vpop.f32.mrf.mxu0
        %v576 = vadd.f32 %v493, %v575
        %v577 = vpop.f32.mrf.mxu0
        %v578 = vadd.f32 %v495, %v577
        %579 = vdwg.mxu0
        %s580 = sadd.s32 %s339, 4
        %s581 = scalar_lea.vmem [#allocation2], %s580
        %v582 = vld [vmem:[%s581] sm:$0xff]
        %v583 = vld [vmem:[%s581 + $0x8] sm:$0xff]
        %v584 = vld [vmem:[%s581 + $0x10] sm:$0xf]
        %s585 = scalar_lea.vmem [#allocation5], 512
        %v586 = vld [vmem:[%s585] sm:$0xff]
        %v587 = vld [vmem:[%s585 + $0x8] sm:$0xff]
        %v588 = vld [vmem:[%s585 + $0x10] sm:$0xff]
        %v589 = vld [vmem:[%s585 + $0x18] sm:$0xff]
        %v590 = vld [vmem:[%s585 + $0x20] sm:$0xff]
        %v591 = vld [vmem:[%s585 + $0x28] sm:$0xff]
        %v592 = vld [vmem:[%s585 + $0x30] sm:$0xff]
        %v593 = vld [vmem:[%s585 + $0x38] sm:$0xff]
        %v594 = vld [vmem:[%s585 + $0x40] sm:$0xff]
        %v595 = vld [vmem:[%s585 + $0x48] sm:$0xff]
        %v596 = vld [vmem:[%s585 + $0x50] sm:$0xff]
        %v597 = vld [vmem:[%s585 + $0x58] sm:$0xff]
        %v598 = vld [vmem:[%s585 + $0x60] sm:$0xff]
        %v599 = vld [vmem:[%s585 + $0x68] sm:$0xff]
        %v600 = vld [vmem:[%s585 + $0x70] sm:$0xff]
        %v601 = vld [vmem:[%s585 + $0x78] sm:$0xff]
        %v602 = vld [vmem:[%s585 + $0x80] sm:$0xff]
        %v603 = vld [vmem:[%s585 + $0x88] sm:$0xff]
        %v604 = vld [vmem:[%s585 + $0x90] sm:$0xff]
        %v605 = vld [vmem:[%s585 + $0x98] sm:$0xff]
        %v606 = vld [vmem:[%s585 + $0xa0] sm:$0xff]
        %v607 = vld [vmem:[%s585 + $0xa8] sm:$0xff]
        %v608 = vld [vmem:[%s585 + $0xb0] sm:$0xff]
        %v609 = vld [vmem:[%s585 + $0xb8] sm:$0xff]
        %v610 = vld [vmem:[%s585 + $0xc0] sm:$0xff]
        %v611 = vld [vmem:[%s585 + $0xc8] sm:$0xff]
        %v612 = vld [vmem:[%s585 + $0xd0] sm:$0xff]
        %v613 = vld [vmem:[%s585 + $0xd8] sm:$0xff]
        %v614 = vld [vmem:[%s585 + $0xe0] sm:$0xff]
        %v615 = vld [vmem:[%s585 + $0xe8] sm:$0xff]
        %v616 = vld [vmem:[%s585 + $0xf0] sm:$0xff]
        %v617 = vld [vmem:[%s585 + $0xf8] sm:$0xff]
        %618 = vmatprep.subr.mxu0 %v617
        %619 = vmatpush1.msra.mxu0 %v616
        %620 = vmatprep.subr.mxu0 %v615
        %621 = vmatpush1.msra.mxu0 %v614
        %622 = vmatprep.subr.mxu0 %v613
        %623 = vmatpush1.msra.mxu0 %v612
        %624 = vmatprep.subr.mxu0 %v611
        %625 = vmatpush1.msra.mxu0 %v610
        %626 = vmatprep.subr.mxu0 %v609
        %627 = vmatpush1.msra.mxu0 %v608
        %628 = vmatprep.subr.mxu0 %v607
        %629 = vmatpush1.msra.mxu0 %v606
        %630 = vmatprep.subr.mxu0 %v605
        %631 = vmatpush1.msra.mxu0 %v604
        %632 = vmatprep.subr.mxu0 %v603
        %633 = vmatpush1.msra.mxu0 %v602
        %634 = vmatprep.subr.mxu0 %v601
        %635 = vmatpush1.msra.mxu0 %v600
        %636 = vmatprep.subr.mxu0 %v599
        %637 = vmatpush1.msra.mxu0 %v598
        %638 = vmatprep.subr.mxu0 %v597
        %639 = vmatpush1.msra.mxu0 %v596
        %640 = vmatprep.subr.mxu0 %v595
        %641 = vmatpush1.msra.mxu0 %v594
        %642 = vmatprep.subr.mxu0 %v593
        %643 = vmatpush1.msra.mxu0 %v592
        %644 = vmatprep.subr.mxu0 %v591
        %645 = vmatpush1.msra.mxu0 %v590
        %646 = vmatprep.subr.mxu0 %v589
        %647 = vmatpush1.msra.mxu0 %v588
        %648 = vmatprep.subr.mxu0 %v587
        %649 = vmatpush1.msra.mxu0 %v586
        %650 = vmatprep.subr.mxu0 0.0
        %651 = vmatpush2.msra.mxu0 0.0
        %652 = vmatprep.subr.mxu0 0.0
        %653 = vmatpush2.msra.mxu0 0.0
        %654 = vmatprep.subr.mxu0 0.0
        %655 = vmatpush2.msra.mxu0 0.0
        %656 = vmatprep.subr.mxu0 0.0
        %657 = vmatpush2.msra.mxu0 0.0
        %658 = vmatprep.subr.mxu0 0.0
        %659 = vmatpush2.msra.mxu0 0.0
        %660 = vmatprep.subr.mxu0 0.0
        %661 = vmatpush2.msra.mxu0 0.0
        %662 = vmatprep.subr.mxu0 0.0
        %663 = vmatpush2.msra.mxu0 0.0
        %664 = vmatprep.subr.mxu0 0.0
        %665 = vmatpush2.msra.mxu0 0.0
        %666 = vmatprep.subr.mxu0 0.0
        %667 = vmatpush2.msra.mxu0 0.0
        %668 = vmatprep.subr.mxu0 0.0
        %669 = vmatpush2.msra.mxu0 0.0
        %670 = vmatprep.subr.mxu0 0.0
        %671 = vmatpush2.msra.mxu0 0.0
        %672 = vmatprep.subr.mxu0 0.0
        %673 = vmatpush2.msra.mxu0 0.0
        %674 = vmatprep.subr.mxu0 0.0
        %675 = vmatpush2.msra.mxu0 0.0
        %676 = vmatprep.subr.mxu0 0.0
        %677 = vmatpush2.msra.mxu0 0.0
        %678 = vmatprep.subr.mxu0 0.0
        %679 = vmatpush2.msra.mxu0 0.0
        %680 = vmatprep.subr.mxu0 0.0
        %681 = vmatpush2.msra.mxu0 0.0
        %682 = vmatprep.mubr.f32.mxu0 0.0
        %683 = vmatmul.mubr.f32.gmra.mxu0 %v582
        %v684 = vpop.f32.mrf.mxu0
        %v685 = vadd.f32 0.0, %v684
        %v686 = vpop.f32.mrf.mxu0
        %v687 = vadd.f32 0.0, %v686
        %688 = vmatprep.mubr.f32.mxu0 0.0
        %689 = vmatmul.mubr.f32.gmra.mxu0 %v583
        %v690 = vpop.f32.mrf.mxu0
        %v691 = vadd.f32 0.0, %v690
        %v692 = vpop.f32.mrf.mxu0
        %v693 = vadd.f32 0.0, %v692
        %694 = vmatprep.mubr.f32.mxu0 0.0
        %695 = vmatmul.mubr.f32.gmra.mxu0 %v584
        %v696 = vpop.f32.mrf.mxu0
        %v697 = vadd.f32 0.0, %v696
        %v698 = vpop.f32.mrf.mxu0
        %v699 = vadd.f32 0.0, %v698
        %700 = vdwg.mxu0
        %v701 = vadd.f32 %v564, %v685
        %v702 = vadd.f32 %v566, %v687
        %v703 = vadd.f32 %v570, %v691
        %v704 = vadd.f32 %v572, %v693
        %v705 = vadd.f32 %v576, %v697
        %v706 = vadd.f32 %v578, %v699
        %v707 = vld [vmem:[%s6] sm:$0x1]
        %v709 = vlaneseq
        %v710 = vshrl.u32 %v709, 7
        %v711 = vsub.s32 0, %v710
        %v712 = vrot.slane %v707, %v711
        %v714 = vadd.f32 %v702, %v712
        %v715 = vadd.f32 %v704, %v712
        %v716 = vadd.f32 %v706, %v712
        %v717 = vld [vmem:[%s2] sm:$0x1]
        %v719 = vlaneseq
        %v720 = vshrl.u32 %v719, 7
        %v721 = vsub.s32 0, %v720
        %v722 = vrot.slane %v717, %v721
        %v724 = vadd.f32 %v701, %v722
        %v725 = vadd.f32 %v703, %v722
        %v726 = vadd.f32 %v705, %v722
        %v727 = vmax.f32 %v724, 0.0
        %v728 = vmax.f32 %v725, 0.0
        %v729 = vmax.f32 %v726, 0.0
        %v730 = vlaneseq
        %v731 = vshrl.u32 %v730, 7
        %v732 = vadd.s32 %v731, 8
        %v733 = vadd.s32 %v731, 16
        %s734 = ssub.s32 4, %s339
        %v735 = vstv %s734
        %vm736 = vcmp.ge.s32.totalorder %v731, %v735
        %vm737 = vcmp.ge.s32.totalorder %v732, %v735
        %vm738 = vcmp.ge.s32.totalorder %v733, %v735
        %v739 = vsel %vm736, 1, 0
        %v740 = vsel %vm737, 1, 0
        %v741 = vsel %vm738, 1, 0
        %vm742 = vcmp.eq.s32.totalorder %v739, 1
        %vm743 = vcmp.eq.s32.totalorder %v740, 1
        %vm744 = vcmp.eq.s32.totalorder %v741, 1
        %v745 = vsel %vm742, %v727, 0.0
        %v746 = vsel %vm743, %v728, 0.0
        %v747 = vsel %vm744, %v729, 0.0
        %v748 = vld [vmem:[#allocation7] sm:$0xff]
        %v749 = vld [vmem:[#allocation7 + $0x8] sm:$0xff]
        %v750 = vld [vmem:[#allocation7 + $0x10] sm:$0xff]
        %v751 = vld [vmem:[#allocation7 + $0x18] sm:$0xff]
        %v752 = vld [vmem:[#allocation7 + $0x20] sm:$0xff]
        %v753 = vld [vmem:[#allocation7 + $0x28] sm:$0xff]
        %v754 = vld [vmem:[#allocation7 + $0x30] sm:$0xff]
        %v755 = vld [vmem:[#allocation7 + $0x38] sm:$0xff]
        %v756 = vld [vmem:[#allocation7 + $0x40] sm:$0xff]
        %v757 = vld [vmem:[#allocation7 + $0x48] sm:$0xff]
        %v758 = vld [vmem:[#allocation7 + $0x50] sm:$0xff]
        %v759 = vld [vmem:[#allocation7 + $0x58] sm:$0xff]
        %v760 = vld [vmem:[#allocation7 + $0x60] sm:$0xff]
        %v761 = vld [vmem:[#allocation7 + $0x68] sm:$0xff]
        %v762 = vld [vmem:[#allocation7 + $0x70] sm:$0xff]
        %v763 = vld [vmem:[#allocation7 + $0x78] sm:$0xff]
        %s764 = scalar_lea.vmem [#allocation7], 128
        %v765 = vld [vmem:[%s764] sm:$0xff]
        %v766 = vld [vmem:[%s764 + $0x8] sm:$0xff]
        %v767 = vld [vmem:[%s764 + $0x10] sm:$0xff]
        %v768 = vld [vmem:[%s764 + $0x18] sm:$0xff]
        %v769 = vld [vmem:[%s764 + $0x20] sm:$0xff]
        %v770 = vld [vmem:[%s764 + $0x28] sm:$0xff]
        %v771 = vld [vmem:[%s764 + $0x30] sm:$0xff]
        %v772 = vld [vmem:[%s764 + $0x38] sm:$0xff]
        %v773 = vld [vmem:[%s764 + $0x40] sm:$0xff]
        %v774 = vld [vmem:[%s764 + $0x48] sm:$0xff]
        %v775 = vld [vmem:[%s764 + $0x50] sm:$0xff]
        %v776 = vld [vmem:[%s764 + $0x58] sm:$0xff]
        %v777 = vld [vmem:[%s764 + $0x60] sm:$0xff]
        %v778 = vld [vmem:[%s764 + $0x68] sm:$0xff]
        %v779 = vld [vmem:[%s764 + $0x70] sm:$0xff]
        %v780 = vld [vmem:[%s764 + $0x78] sm:$0xff]
        %vm784 = vcmask 1045504
        %v785 = vrot.slane %v745, 2
        %v786 = vrot.slane %v746, 2
        %v787 = vsel %vm784, %v785, %v786
        %v788 = vrot.slane %v747, 2
        %v789 = vsel %vm784, %v786, %v788
        %792 = vmatprep.subr.mxu0 0.0
        %793 = vmatpush1.msra.mxu0 %v780
        %794 = vmatprep.subr.mxu0 0.0
        %795 = vmatpush1.msra.mxu0 %v779
        %796 = vmatprep.subr.mxu0 0.0
        %797 = vmatpush1.msra.mxu0 %v778
        %798 = vmatprep.subr.mxu0 0.0
        %799 = vmatpush1.msra.mxu0 %v777
        %800 = vmatprep.subr.mxu0 0.0
        %801 = vmatpush1.msra.mxu0 %v776
        %802 = vmatprep.subr.mxu0 0.0
        %803 = vmatpush1.msra.mxu0 %v775
        %804 = vmatprep.subr.mxu0 0.0
        %805 = vmatpush1.msra.mxu0 %v774
        %806 = vmatprep.subr.mxu0 0.0
        %807 = vmatpush1.msra.mxu0 %v773
        %808 = vmatprep.subr.mxu0 0.0
        %809 = vmatpush1.msra.mxu0 %v772
        %810 = vmatprep.subr.mxu0 0.0
        %811 = vmatpush1.msra.mxu0 %v771
        %812 = vmatprep.subr.mxu0 0.0
        %813 = vmatpush1.msra.mxu0 %v770
        %814 = vmatprep.subr.mxu0 0.0
        %815 = vmatpush1.msra.mxu0 %v769
        %816 = vmatprep.subr.mxu0 0.0
        %817 = vmatpush1.msra.mxu0 %v768
        %818 = vmatprep.subr.mxu0 0.0
        %819 = vmatpush1.msra.mxu0 %v767
        %820 = vmatprep.subr.mxu0 0.0
        %821 = vmatpush1.msra.mxu0 %v766
        %822 = vmatprep.subr.mxu0 0.0
        %823 = vmatpush1.msra.mxu0 %v765
        %824 = vmatprep.subr.mxu0 0.0
        %825 = vmatpush2.msra.mxu0 0.0
        %826 = vmatprep.subr.mxu0 0.0
        %827 = vmatpush2.msra.mxu0 0.0
        %828 = vmatprep.subr.mxu0 0.0
        %829 = vmatpush2.msra.mxu0 0.0
        %830 = vmatprep.subr.mxu0 0.0
        %831 = vmatpush2.msra.mxu0 0.0
        %832 = vmatprep.subr.mxu0 0.0
        %833 = vmatpush2.msra.mxu0 0.0
        %834 = vmatprep.subr.mxu0 0.0
        %835 = vmatpush2.msra.mxu0 0.0
        %836 = vmatprep.subr.mxu0 0.0
        %837 = vmatpush2.msra.mxu0 0.0
        %838 = vmatprep.subr.mxu0 0.0
        %839 = vmatpush2.msra.mxu0 0.0
        %840 = vmatprep.subr.mxu0 0.0
        %841 = vmatpush2.msra.mxu0 0.0
        %842 = vmatprep.subr.mxu0 0.0
        %843 = vmatpush2.msra.mxu0 0.0
        %844 = vmatprep.subr.mxu0 0.0
        %845 = vmatpush2.msra.mxu0 0.0
        %846 = vmatprep.subr.mxu0 0.0
        %847 = vmatpush2.msra.mxu0 0.0
        %848 = vmatprep.subr.mxu0 0.0
        %849 = vmatpush2.msra.mxu0 0.0
        %850 = vmatprep.subr.mxu0 0.0
        %851 = vmatpush2.msra.mxu0 0.0
        %852 = vmatprep.subr.mxu0 0.0
        %853 = vmatpush2.msra.mxu0 0.0
        %854 = vmatprep.subr.mxu0 0.0
        %855 = vmatpush2.msra.mxu0 0.0
        %856 = vmatprep.mubr.f32.mxu0 0.0
        %857 = vmatmul.mubr.f32.gmra.mxu0 %v787
        %v858 = vpop.f32.mrf.mxu0
        %v859 = vadd.f32 0.0, %v858
        %v860 = vpop.f32.mrf.mxu0
        %861 = vmatprep.mubr.f32.mxu0 0.0
        %862 = vmatmul.mubr.f32.gmra.mxu0 %v789
        %v863 = vpop.f32.mrf.mxu0
        %v864 = vadd.f32 0.0, %v863
        %v865 = vpop.f32.mrf.mxu0
        %866 = vdwg.mxu0
        %867 = vmatprep.subr.mxu0 0.0
        %868 = vmatpush1.msra.mxu0 %v763
        %869 = vmatprep.subr.mxu0 0.0
        %870 = vmatpush1.msra.mxu0 %v762
        %871 = vmatprep.subr.mxu0 0.0
        %872 = vmatpush1.msra.mxu0 %v761
        %873 = vmatprep.subr.mxu0 0.0
        %874 = vmatpush1.msra.mxu0 %v760
        %875 = vmatprep.subr.mxu0 0.0
        %876 = vmatpush1.msra.mxu0 %v759
        %877 = vmatprep.subr.mxu0 0.0
        %878 = vmatpush1.msra.mxu0 %v758
        %879 = vmatprep.subr.mxu0 0.0
        %880 = vmatpush1.msra.mxu0 %v757
        %881 = vmatprep.subr.mxu0 0.0
        %882 = vmatpush1.msra.mxu0 %v756
        %883 = vmatprep.subr.mxu0 0.0
        %884 = vmatpush1.msra.mxu0 %v755
        %885 = vmatprep.subr.mxu0 0.0
        %886 = vmatpush1.msra.mxu0 %v754
        %887 = vmatprep.subr.mxu0 0.0
        %888 = vmatpush1.msra.mxu0 %v753
        %889 = vmatprep.subr.mxu0 0.0
        %890 = vmatpush1.msra.mxu0 %v752
        %891 = vmatprep.subr.mxu0 0.0
        %892 = vmatpush1.msra.mxu0 %v751
        %893 = vmatprep.subr.mxu0 0.0
        %894 = vmatpush1.msra.mxu0 %v750
        %895 = vmatprep.subr.mxu0 0.0
        %896 = vmatpush1.msra.mxu0 %v749
        %897 = vmatprep.subr.mxu0 0.0
        %898 = vmatpush1.msra.mxu0 %v748
        %899 = vmatprep.subr.mxu0 0.0
        %900 = vmatpush2.msra.mxu0 0.0
        %901 = vmatprep.subr.mxu0 0.0
        %902 = vmatpush2.msra.mxu0 0.0
        %903 = vmatprep.subr.mxu0 0.0
        %904 = vmatpush2.msra.mxu0 0.0
        %905 = vmatprep.subr.mxu0 0.0
        %906 = vmatpush2.msra.mxu0 0.0
        %907 = vmatprep.subr.mxu0 0.0
        %908 = vmatpush2.msra.mxu0 0.0
        %909 = vmatprep.subr.mxu0 0.0
        %910 = vmatpush2.msra.mxu0 0.0
        %911 = vmatprep.subr.mxu0 0.0
        %912 = vmatpush2.msra.mxu0 0.0
        %913 = vmatprep.subr.mxu0 0.0
        %914 = vmatpush2.msra.mxu0 0.0
        %915 = vmatprep.subr.mxu0 0.0
        %916 = vmatpush2.msra.mxu0 0.0
        %917 = vmatprep.subr.mxu0 0.0
        %918 = vmatpush2.msra.mxu0 0.0
        %919 = vmatprep.subr.mxu0 0.0
        %920 = vmatpush2.msra.mxu0 0.0
        %921 = vmatprep.subr.mxu0 0.0
        %922 = vmatpush2.msra.mxu0 0.0
        %923 = vmatprep.subr.mxu0 0.0
        %924 = vmatpush2.msra.mxu0 0.0
        %925 = vmatprep.subr.mxu0 0.0
        %926 = vmatpush2.msra.mxu0 0.0
        %927 = vmatprep.subr.mxu0 0.0
        %928 = vmatpush2.msra.mxu0 0.0
        %929 = vmatprep.subr.mxu0 0.0
        %930 = vmatpush2.msra.mxu0 0.0
        %931 = vmatprep.mubr.f32.mxu0 0.0
        %932 = vmatmul.mubr.f32.gmra.mxu0 %v745
        %v933 = vpop.f32.mrf.mxu0
        %v934 = vadd.f32 %v859, %v933
        %v935 = vpop.f32.mrf.mxu0
        %936 = vmatprep.mubr.f32.mxu0 0.0
        %937 = vmatmul.mubr.f32.gmra.mxu0 %v746
        %v938 = vpop.f32.mrf.mxu0
        %v939 = vadd.f32 %v864, %v938
        %v940 = vpop.f32.mrf.mxu0
        %941 = vdwg.mxu0
        %s942 = scalar_lea.vmem [#allocation7], 256
        %v943 = vld [vmem:[%s942] sm:$0xff]
        %v944 = vld [vmem:[%s942 + $0x8] sm:$0xff]
        %v945 = vld [vmem:[%s942 + $0x10] sm:$0xff]
        %v946 = vld [vmem:[%s942 + $0x18] sm:$0xff]
        %v947 = vld [vmem:[%s942 + $0x20] sm:$0xff]
        %v948 = vld [vmem:[%s942 + $0x28] sm:$0xff]
        %v949 = vld [vmem:[%s942 + $0x30] sm:$0xff]
        %v950 = vld [vmem:[%s942 + $0x38] sm:$0xff]
        %v951 = vld [vmem:[%s942 + $0x40] sm:$0xff]
        %v952 = vld [vmem:[%s942 + $0x48] sm:$0xff]
        %v953 = vld [vmem:[%s942 + $0x50] sm:$0xff]
        %v954 = vld [vmem:[%s942 + $0x58] sm:$0xff]
        %v955 = vld [vmem:[%s942 + $0x60] sm:$0xff]
        %v956 = vld [vmem:[%s942 + $0x68] sm:$0xff]
        %v957 = vld [vmem:[%s942 + $0x70] sm:$0xff]
        %v958 = vld [vmem:[%s942 + $0x78] sm:$0xff]
        %vm959 = vcmask 1043456
        %v960 = vrot.slane %v745, 4
        %v961 = vrot.slane %v746, 4
        %v962 = vsel %vm959, %v960, %v961
        %v963 = vrot.slane %v747, 4
        %v964 = vsel %vm959, %v961, %v963
        %967 = vmatprep.subr.mxu0 0.0
        %968 = vmatpush1.msra.mxu0 %v958
        %969 = vmatprep.subr.mxu0 0.0
        %970 = vmatpush1.msra.mxu0 %v957
        %971 = vmatprep.subr.mxu0 0.0
        %972 = vmatpush1.msra.mxu0 %v956
        %973 = vmatprep.subr.mxu0 0.0
        %974 = vmatpush1.msra.mxu0 %v955
        %975 = vmatprep.subr.mxu0 0.0
        %976 = vmatpush1.msra.mxu0 %v954
        %977 = vmatprep.subr.mxu0 0.0
        %978 = vmatpush1.msra.mxu0 %v953
        %979 = vmatprep.subr.mxu0 0.0
        %980 = vmatpush1.msra.mxu0 %v952
        %981 = vmatprep.subr.mxu0 0.0
        %982 = vmatpush1.msra.mxu0 %v951
        %983 = vmatprep.subr.mxu0 0.0
        %984 = vmatpush1.msra.mxu0 %v950
        %985 = vmatprep.subr.mxu0 0.0
        %986 = vmatpush1.msra.mxu0 %v949
        %987 = vmatprep.subr.mxu0 0.0
        %988 = vmatpush1.msra.mxu0 %v948
        %989 = vmatprep.subr.mxu0 0.0
        %990 = vmatpush1.msra.mxu0 %v947
        %991 = vmatprep.subr.mxu0 0.0
        %992 = vmatpush1.msra.mxu0 %v946
        %993 = vmatprep.subr.mxu0 0.0
        %994 = vmatpush1.msra.mxu0 %v945
        %995 = vmatprep.subr.mxu0 0.0
        %996 = vmatpush1.msra.mxu0 %v944
        %997 = vmatprep.subr.mxu0 0.0
        %998 = vmatpush1.msra.mxu0 %v943
        %999 = vmatprep.subr.mxu0 0.0
        %1000 = vmatpush2.msra.mxu0 0.0
        %1001 = vmatprep.subr.mxu0 0.0
        %1002 = vmatpush2.msra.mxu0 0.0
        %1003 = vmatprep.subr.mxu0 0.0
        %1004 = vmatpush2.msra.mxu0 0.0
        %1005 = vmatprep.subr.mxu0 0.0
        %1006 = vmatpush2.msra.mxu0 0.0
        %1007 = vmatprep.subr.mxu0 0.0
        %1008 = vmatpush2.msra.mxu0 0.0
        %1009 = vmatprep.subr.mxu0 0.0
        %1010 = vmatpush2.msra.mxu0 0.0
        %1011 = vmatprep.subr.mxu0 0.0
        %1012 = vmatpush2.msra.mxu0 0.0
        %1013 = vmatprep.subr.mxu0 0.0
        %1014 = vmatpush2.msra.mxu0 0.0
        %1015 = vmatprep.subr.mxu0 0.0
        %1016 = vmatpush2.msra.mxu0 0.0
        %1017 = vmatprep.subr.mxu0 0.0
        %1018 = vmatpush2.msra.mxu0 0.0
        %1019 = vmatprep.subr.mxu0 0.0
        %1020 = vmatpush2.msra.mxu0 0.0
        %1021 = vmatprep.subr.mxu0 0.0
        %1022 = vmatpush2.msra.mxu0 0.0
        %1023 = vmatprep.subr.mxu0 0.0
        %1024 = vmatpush2.msra.mxu0 0.0
        %1025 = vmatprep.subr.mxu0 0.0
        %1026 = vmatpush2.msra.mxu0 0.0
        %1027 = vmatprep.subr.mxu0 0.0
        %1028 = vmatpush2.msra.mxu0 0.0
        %1029 = vmatprep.subr.mxu0 0.0
        %1030 = vmatpush2.msra.mxu0 0.0
        %1031 = vmatprep.mubr.f32.mxu0 0.0
        %1032 = vmatmul.mubr.f32.gmra.mxu0 %v962
        %v1033 = vpop.f32.mrf.mxu0
        %v1034 = vadd.f32 0.0, %v1033
        %v1035 = vpop.f32.mrf.mxu0
        %1036 = vmatprep.mubr.f32.mxu0 0.0
        %1037 = vmatmul.mubr.f32.gmra.mxu0 %v964
        %v1038 = vpop.f32.mrf.mxu0
        %v1039 = vadd.f32 0.0, %v1038
        %v1040 = vpop.f32.mrf.mxu0
        %1041 = vdwg.mxu0
        %v1042 = vadd.f32 %v934, %v1034
        %v1043 = vadd.f32 %v939, %v1039
        %v1044 = vld [vmem:[%s4] sm:$0x1]
        %v1046 = vlaneseq
        %v1047 = vshrl.u32 %v1046, 7
        %v1048 = vsub.s32 0, %v1047
        %v1049 = vrot.slane %v1044, %v1048
        %v1051 = vadd.f32 %v1042, %v1049
        %v1052 = vadd.f32 %v1043, %v1049
        %v1053 = vmax.f32 %v1051, 0.0
        %v1054 = vmax.f32 %v1052, 0.0
        %v1058 = vrot.slane %v714, 4
        %v1059 = vrot.slane %v715, 4
        %v1060 = vsel %vm959, %v1058, %v1059
        %v1061 = vrot.slane %v716, 4
        %v1062 = vsel %vm959, %v1059, %v1061
        %v1065 = vadd.f32 %v1053, %v1060
        %v1066 = vadd.f32 %v1054, %v1062
        %v1067 = vmax.f32 %v1065, 0.0
        %v1068 = vmax.f32 %v1066, 0.0
        %1069 = vst [vmem:[%s337] sm:$0xff] %v1067
        %1070 = vst [vmem:[%s337 + $0x8] sm:$0xff] %v1068
        %s1071 = sand.u32 %s198, 1
        %s1072 = scalar_lea.sflag [#allocation4], %s1071
        %s1073 = sand.u32 %s198, 1
        %s1074 = smul.addr %s1073, 16
        %s1075 = scalar_lea.vmem [#allocation10], %s1074
        // Predicated region
        $region65: #{tpu_custom_call.1} parent=47 // pred_check
          %p1076 = pneg %p208
        $region66: #{tpu_custom_call.1} parent=47 // pred_check_branch
          %1078 = sbr.rel (%p1076) target = $region68
        $region67: #{tpu_custom_call.1} parent=47 // pred_region
          %s1079 = smul.u32 2, %s29
          %s1081 = ssub.s32 256, 256
          %1082 = vsyncadd %s1072, %s1081
          %s1083 = smul.addr %s28, 2
          %s1084 = sadd.s32 %s1079, %s1083
          %s1085 = smul.addr %s1084, 128
          %s1086 = scalar_lea.hbm %s7, %s1085
          %s1087 = sshll.u32 %s1075, 4
          %s1088 = int_to_ptr.vmem [resolvable:$true] %s1087
          %1093 = dma.vmem_to_hbm [thread:$0]  %s1088, 256, %s1086, %s1072, 128, 128, 8
        $region68: #{tpu_custom_call.1} parent=47 // pred_fallthru
          _
      $region48: #{tpu_custom_call.1} parent=5 // pred_fallthru
        _
      %p1094 = scmp.le.s32.totalorder 2, %s19
      // Predicated region
      $region69: #{tpu_custom_call.1} parent=5 // pred_check
        %p1095 = pneg %p1094
      $region70: #{tpu_custom_call.1} parent=5 // pred_check_branch
        %1097 = sbr.rel (%p1095) target = $region72
      $region71: #{tpu_custom_call.1} parent=5 // pred_region
        %s1098 = ssub.s32 %s19, 2
        // Predicated region
        $region73: #{tpu_custom_call.1} parent=71 // pred_check
          %p1099 = pneg %p214
        $region74: #{tpu_custom_call.1} parent=71 // pred_check_branch
          %1101 = sbr.rel (%p1099) target = $region76
        $region75: #{tpu_custom_call.1} parent=71 // pred_region
          %s1102 = sand.u32 %s199, 1
          %s1103 = scalar_lea.sflag [#allocation4], %s1102
          %s1104 = sand.u32 %s199, 1
          %s1105 = smul.addr %s1104, 16
          %s1106 = scalar_lea.vmem [#allocation10], %s1105
          %1107 = dma.done %s1103, 256
        $region76: #{tpu_custom_call.1} parent=71 // pred_fallthru
          _
      $region72: #{tpu_custom_call.1} parent=5 // pred_fallthru
        _
    $region6: #{tpu_custom_call.1} parent=1 // loop_footer
      %s23 = sadd.s32 1, %s19
    $region7: #{tpu_custom_call.1} parent=1 // loop_footer_branch
      %18 = sbr.rel target = $region3
    $region8: #{tpu_custom_call.1} parent=1 // loop_exit
      _
    %1108 = vsyncpa [#allocation3], 1
    %s1109 = scalar_lea.sflag [#allocation3], 1
    %1110 = vsyncpa %s1109, 1
    %1111 = vsyncpa [#allocation6], 1
    %1112 = vsyncpa [#allocation9], 1
    %1113 = vsyncpa [#allocation4], 1
    %s1114 = scalar_lea.sflag [#allocation4], 1
    %1115 = vsyncpa %s1114, 1

// kernel: tpu_custom_call.1
$region0: #{tpu_custom_call.1}
  #allocation0 [shape = 'u32[]', space=smem, size = 0x4, offset = 0x4, fixed_abs, tag = 'smem constant byte address 0x4 - core index']
  #allocation1 [shape = 'u32[144,128]{1,0:T(1,128)}', space=vmem, size = 0x12000, scoped, tag = 'internal scratch']
  %s0 = inlined_call_operand.hbm [shape: f32[2,24,128], index: 0, kind: input, shape index: {}]
  %s1 = inlined_call_operand.hbm [shape: f32[3,128,256], index: 1, kind: input, shape index: {}]
  %s2 = inlined_call_operand.vmem [shape: f32[1,128], index: 2, kind: input, shape index: {}]
  %s3 = inlined_call_operand.hbm [shape: f32[3,128,128], index: 3, kind: input, shape index: {}]
  %s4 = inlined_call_operand.vmem [shape: f32[1,128], index: 4, kind: input, shape index: {}]
  %s5 = inlined_call_operand.hbm [shape: f32[128,128], index: 5, kind: input, shape index: {}]
  %s6 = inlined_call_operand.vmem [shape: f32[1,128], index: 6, kind: input, shape index: {}]
  %s7 = inlined_call_operand.hbm [shape: f32[2,16,128], index: 7, kind: output, shape index: {}]
  %s8 = sld [smem:[#allocation0]]
  $region77: #{tpu_custom_call.1} parent=0
    _
  %s10 = ssub.s32 1, %s8
  %s11 = scalar_select 0, %s10, %s8
  $region1: #{tpu_custom_call.1} parent=0
    #allocation2 [shape = 'u8[24576]{0}', space=vmem, size = 0x6000, scoped, tag = 'input window, operand 0']
    #allocation3 [shape = 's32[2]{0}', space=sflag, size = 0x8, scoped, tag = 'scoped memory for tpu_custom_call.1']
    #allocation4 [shape = 's32[2]{0}', space=sflag, size = 0x8, scoped, tag = 'scoped memory for tpu_custom_call.1']
    #allocation5 [shape = 'u8[393216]{0}', space=vmem, size = 0x60000, scoped, tag = 'input window, operand 1, single buffered']
    #allocation6 [shape = 's32[1]{0}', space=sflag, size = 0x4, scoped, tag = 'scoped memory for tpu_custom_call.1']
    #allocation7 [shape = 'u8[196608]{0}', space=vmem, size = 0x30000, scoped, tag = 'input window, operand 3, single buffered']
    #allocation8 [shape = 'u8[65536]{0}', space=vmem, size = 0x10000, scoped, tag = 'input window, operand 5, single buffered']
    #allocation9 [shape = 's32[1]{0}', space=sflag, size = 0x4, scoped, tag = 'scoped memory for tpu_custom_call.1']
    #allocation10 [shape = 'u8[16384]{0}', space=vmem, size = 0x4000, scoped, tag = 'output window, operand 0']
    %12 = vsyncpa [#allocation3], 0
    %s13 = scalar_lea.sflag [#allocation3], 1
    %14 = vsyncpa %s13, 0
    %15 = vsyncpa [#allocation6], 0
    %16 = vsyncpa [#allocation9], 0
    %17 = vsyncpa [#allocation4], 0
    %s18 = scalar_lea.sflag [#allocation4], 1
    %19 = vsyncpa %s18, 0
    loop: start=0, step=1, limit=4
    $region2: #{tpu_custom_call.1} parent=1 // loop_pre_header
      _
    $region3: #{tpu_custom_call.1} parent=1 // loop_header
      %s21 = sphi 0, %s25
      %p22 = scmp.ge.s32.totalorder %s21, 4
      %s28 = sphi 0, %s40
      %s29 = sphi 0, %s36
      %s30 = sphi 0, %s28
      %s31 = sphi 0, %s29
      %s32 = sphi 0, %s30
      %s33 = sphi 0, %s31
      %s43 = sphi 0, %s45
      %s46 = sphi 0, %s43
      %s47 = sphi 0, %s46
      %s63 = sphi 0, %s47
      %s67 = sphi 0, %s67
      %s69 = sphi 0, %s67
      %s70 = sphi 0, %s69
      %s84 = sphi 0, %s70
      %s88 = sphi 0, %s88
      %s90 = sphi 0, %s88
      %s91 = sphi 0, %s90
      %s105 = sphi 0, %s91
      %s109 = sphi 0, %s109
      %s111 = sphi 0, %s109
      %s112 = sphi 0, %s111
      %s126 = sphi 0, %s112
      %s130 = sphi 0, %s130
      %s132 = sphi 0, %s130
      %s133 = sphi 0, %s132
      %s147 = sphi 0, %s133
      %s151 = sphi 0, %s151
      %s153 = sphi 0, %s151
      %s154 = sphi 0, %s153
      %s168 = sphi 0, %s154
      %s172 = sphi 0, %s172
      %s174 = sphi 0, %s172
      %s175 = sphi 0, %s174
      %s189 = sphi 0, %s175
      %s197 = sphi 0, %s199
      %s200 = sphi 0, %s197
      %s201 = sphi 0, %s200
      %s217 = sphi 0, %s201
    $region4: #{tpu_custom_call.1} parent=1 // loop_header_branch
      %24 = sbr.rel (%p22) target = $region8
    $region5: #{tpu_custom_call.1} parent=1 // loop_body
      %s26 = ssub.s32 %s21, 1
      %s27 = ssub.s32 %s21, 2
      %s34 = sadd.s32 1, %s29
      %p35 = scmp.ge.s32.totalorder %s34, 1
      %s36 = scalar_select %p35, 0, %s34
      %s37 = sadd.s32 1, %s28
      %s38 = scalar_select %p35, %s37, %s28
      %p39 = scmp.ge.s32.totalorder %s38, 2
      %s40 = scalar_select %p39, 0, %s38
      %s41 = ssub.s32 %s28, %s40
      %p42 = scmp.eq.s32.totalorder %s41, 0
      %s44 = sadd.s32 %s43, 1
      %s45 = scalar_select %p42, %s43, %s44
      %p48 = pneg %p42
      %p49 = scmp.eq.s32.totalorder %s21, 1
      %p50 = por %p48, %p49
      %p51 = scmp.ne.s32.totalorder %s43, %s46
      %p52 = scmp.eq.s32.totalorder %s21, 0
      %p53 = por %p51, %p52
      %p54 = scmp.ne.s32.totalorder %s43, %s46
      %p55 = scmp.eq.s32.totalorder %s26, 1
      %p56 = por %p54, %p55
      %p57 = scmp.ne.s32.totalorder %s46, %s47
      %p58 = scmp.eq.s32.totalorder %s26, 0
      %p59 = por %p57, %p58
      %p60 = scmp.ne.s32.totalorder %s46, %s47
      %p61 = scmp.eq.s32.totalorder %s27, 1
      %p62 = por %p60, %p61
      %p64 = scmp.ne.s32.totalorder %s47, %s63
      %p65 = scmp.eq.s32.totalorder %s27, 0
      %p66 = por %p64, %p65
      %s68 = sadd.s32 %s67, 1
      %p71 = scmp.eq.s32.totalorder %s21, 1
      %p72 = scmp.ne.s32.totalorder %s67, %s69
      %p73 = scmp.eq.s32.totalorder %s21, 0
      %p74 = por %p72, %p73
      %p75 = scmp.ne.s32.totalorder %s67, %s69
      %p76 = scmp.eq.s32.totalorder %s26, 1
      %p77 = por %p75, %p76
      %p78 = scmp.ne.s32.totalorder %s69, %s70
      %p79 = scmp.eq.s32.totalorder %s26, 0
      %p80 = por %p78, %p79
      %p81 = scmp.ne.s32.totalorder %s69, %s70
      %p82 = scmp.eq.s32.totalorder %s27, 1
      %p83 = por %p81, %p82
      %p85 = scmp.ne.s32.totalorder %s70, %s84
      %p86 = scmp.eq.s32.totalorder %s27, 0
      %p87 = por %p85, %p86
      %s89 = sadd.s32 %s88, 1
      %p92 = scmp.eq.s32.totalorder %s21, 1
      %p93 = scmp.ne.s32.totalorder %s88, %s90
      %p94 = scmp.eq.s32.totalorder %s21, 0
      %p95 = por %p93, %p94
      %p96 = scmp.ne.s32.totalorder %s88, %s90
      %p97 = scmp.eq.s32.totalorder %s26, 1
      %p98 = por %p96, %p97
      %p99 = scmp.ne.s32.totalorder %s90, %s91
      %p100 = scmp.eq.s32.totalorder %s26, 0
      %p101 = por %p99, %p100
      %p102 = scmp.ne.s32.totalorder %s90, %s91
      %p103 = scmp.eq.s32.totalorder %s27, 1
      %p104 = por %p102, %p103
      %p106 = scmp.ne.s32.totalorder %s91, %s105
      %p107 = scmp.eq.s32.totalorder %s27, 0
      %p108 = por %p106, %p107
      %s110 = sadd.s32 %s109, 1
      %p113 = scmp.eq.s32.totalorder %s21, 1
      %p114 = scmp.ne.s32.totalorder %s109, %s111
      %p115 = scmp.eq.s32.totalorder %s21, 0
      %p116 = por %p114, %p115
      %p117 = scmp.ne.s32.totalorder %s109, %s111
      %p118 = scmp.eq.s32.totalorder %s26, 1
      %p119 = por %p117, %p118
      %p120 = scmp.ne.s32.totalorder %s111, %s112
      %p121 = scmp.eq.s32.totalorder %s26, 0
      %p122 = por %p120, %p121
      %p123 = scmp.ne.s32.totalorder %s111, %s112
      %p124 = scmp.eq.s32.totalorder %s27, 1
      %p125 = por %p123, %p124
      %p127 = scmp.ne.s32.totalorder %s112, %s126
      %p128 = scmp.eq.s32.totalorder %s27, 0
      %p129 = por %p127, %p128
      %s131 = sadd.s32 %s130, 1
      %p134 = scmp.eq.s32.totalorder %s21, 1
      %p135 = scmp.ne.s32.totalorder %s130, %s132
      %p136 = scmp.eq.s32.totalorder %s21, 0
      %p137 = por %p135, %p136
      %p138 = scmp.ne.s32.totalorder %s130, %s132
      %p139 = scmp.eq.s32.totalorder %s26, 1
      %p140 = por %p138, %p139
      %p141 = scmp.ne.s32.totalorder %s132, %s133
      %p142 = scmp.eq.s32.totalorder %s26, 0
      %p143 = por %p141, %p142
      %p144 = scmp.ne.s32.totalorder %s132, %s133
      %p145 = scmp.eq.s32.totalorder %s27, 1
      %p146 = por %p144, %p145
      %p148 = scmp.ne.s32.totalorder %s133, %s147
      %p149 = scmp.eq.s32.totalorder %s27, 0
      %p150 = por %p148, %p149
      %s152 = sadd.s32 %s151, 1
      %p155 = scmp.eq.s32.totalorder %s21, 1
      %p156 = scmp.ne.s32.totalorder %s151, %s153
      %p157 = scmp.eq.s32.totalorder %s21, 0
      %p158 = por %p156, %p157
      %p159 = scmp.ne.s32.totalorder %s151, %s153
      %p160 = scmp.eq.s32.totalorder %s26, 1
      %p161 = por %p159, %p160
      %p162 = scmp.ne.s32.totalorder %s153, %s154
      %p163 = scmp.eq.s32.totalorder %s26, 0
      %p164 = por %p162, %p163
      %p165 = scmp.ne.s32.totalorder %s153, %s154
      %p166 = scmp.eq.s32.totalorder %s27, 1
      %p167 = por %p165, %p166
      %p169 = scmp.ne.s32.totalorder %s154, %s168
      %p170 = scmp.eq.s32.totalorder %s27, 0
      %p171 = por %p169, %p170
      %s173 = sadd.s32 %s172, 1
      %p176 = scmp.eq.s32.totalorder %s21, 1
      %p177 = scmp.ne.s32.totalorder %s172, %s174
      %p178 = scmp.eq.s32.totalorder %s21, 0
      %p179 = por %p177, %p178
      %p180 = scmp.ne.s32.totalorder %s172, %s174
      %p181 = scmp.eq.s32.totalorder %s26, 1
      %p182 = por %p180, %p181
      %p183 = scmp.ne.s32.totalorder %s174, %s175
      %p184 = scmp.eq.s32.totalorder %s26, 0
      %p185 = por %p183, %p184
      %p186 = scmp.ne.s32.totalorder %s174, %s175
      %p187 = scmp.eq.s32.totalorder %s27, 1
      %p188 = por %p186, %p187
      %p190 = scmp.ne.s32.totalorder %s175, %s189
      %p191 = scmp.eq.s32.totalorder %s27, 0
      %p192 = por %p190, %p191
      %s193 = ssub.s32 %s28, %s40
      %s194 = ssub.s32 %s29, %s36
      %s195 = sor.u32 %s193, %s194
      %p196 = scmp.eq.s32.totalorder %s195, 0
      %s198 = sadd.s32 %s197, 1
      %s199 = scalar_select %p196, %s197, %s198
      %p202 = pneg %p196
      %p203 = scmp.eq.s32.totalorder %s21, 1
      %p204 = por %p202, %p203
      %p205 = scmp.ne.s32.totalorder %s197, %s200
      %p206 = scmp.eq.s32.totalorder %s21, 0
      %p207 = por %p205, %p206
      %p208 = scmp.ne.s32.totalorder %s197, %s200
      %p209 = scmp.eq.s32.totalorder %s26, 1
      %p210 = por %p208, %p209
      %p211 = scmp.ne.s32.totalorder %s200, %s201
      %p212 = scmp.eq.s32.totalorder %s26, 0
      %p213 = por %p211, %p212
      %p214 = scmp.ne.s32.totalorder %s200, %s201
      %p215 = scmp.eq.s32.totalorder %s27, 1
      %p216 = por %p214, %p215
      %p218 = scmp.ne.s32.totalorder %s201, %s217
      %p219 = scmp.eq.s32.totalorder %s27, 0
      %p220 = por %p218, %p219
      %p221 = scmp.le.s32.totalorder 1, %s21
      %p222 = scmp.lt.s32.totalorder %s21, 3
      %p223 = pnand %p221, %p222
      %p224 = pneg %p223
      // Predicated region
      $region9: #{tpu_custom_call.1} parent=5 // pred_check
        _
      $region10: #{tpu_custom_call.1} parent=5 // pred_check_branch
        %226 = sbr.rel (%p223) target = $region12
      $region11: #{tpu_custom_call.1} parent=5 // pred_region
        %s227 = ssub.s32 %s21, 1
        // Predicated region
        $region13: #{tpu_custom_call.1} parent=11 // pred_check
          %p228 = pneg %p80
        $region14: #{tpu_custom_call.1} parent=11 // pred_check_branch
          %230 = sbr.rel (%p228) target = $region16
        $region15: #{tpu_custom_call.1} parent=11 // pred_region
          %s232 = ssub.s32 12288, 12288
          %233 = vsyncadd [#allocation6], %s232
          %s234 = sshll.u32 [#allocation5], 4
          %s235 = int_to_ptr.vmem [resolvable:$true] %s234
          %240 = dma.hbm_to_vmem [thread:$0]  %s1, 12288, %s235, [#allocation6], 256, 256, 16
        $region16: #{tpu_custom_call.1} parent=11 // pred_fallthru
          _
        // Predicated region
        $region17: #{tpu_custom_call.1} parent=11 // pred_check
          %p241 = pneg %p101
        $region18: #{tpu_custom_call.1} parent=11 // pred_check_branch
          %243 = sbr.rel (%p241) target = $region20
        $region19: #{tpu_custom_call.1} parent=11 // pred_region
          _
        $region20: #{tpu_custom_call.1} parent=11 // pred_fallthru
          _
        // Predicated region
        $region21: #{tpu_custom_call.1} parent=11 // pred_check
          %p244 = pneg %p122
        $region22: #{tpu_custom_call.1} parent=11 // pred_check_branch
          %246 = sbr.rel (%p244) target = $region24
        $region23: #{tpu_custom_call.1} parent=11 // pred_region
          %s248 = ssub.s32 6144, 6144
          %249 = vsyncadd [#allocation6], %s248
          %s250 = sshll.u32 [#allocation7], 4
          %s251 = int_to_ptr.vmem [resolvable:$true] %s250
          %256 = dma.hbm_to_vmem [thread:$0]  %s3, 6144, %s251, [#allocation6], 128, 128, 8
        $region24: #{tpu_custom_call.1} parent=11 // pred_fallthru
          _
        // Predicated region
        $region25: #{tpu_custom_call.1} parent=11 // pred_check
          %p257 = pneg %p143
        $region26: #{tpu_custom_call.1} parent=11 // pred_check_branch
          %259 = sbr.rel (%p257) target = $region28
        $region27: #{tpu_custom_call.1} parent=11 // pred_region
          _
        $region28: #{tpu_custom_call.1} parent=11 // pred_fallthru
          _
        // Predicated region
        $region29: #{tpu_custom_call.1} parent=11 // pred_check
          %p260 = pneg %p164
        $region30: #{tpu_custom_call.1} parent=11 // pred_check_branch
          %262 = sbr.rel (%p260) target = $region32
        $region31: #{tpu_custom_call.1} parent=11 // pred_region
          %s264 = ssub.s32 2048, 2048
          %265 = vsyncadd [#allocation9], %s264
          %s266 = sshll.u32 [#allocation8], 4
          %s267 = int_to_ptr.vmem [resolvable:$true] %s266
          %272 = dma.hbm_to_vmem [thread:$0]  %s5, 2048, %s267, [#allocation9], 128, 128, 8
        $region32: #{tpu_custom_call.1} parent=11 // pred_fallthru
          _
        // Predicated region
        $region33: #{tpu_custom_call.1} parent=11 // pred_check
          %p273 = pneg %p185
        $region34: #{tpu_custom_call.1} parent=11 // pred_check_branch
          %275 = sbr.rel (%p273) target = $region36
        $region35: #{tpu_custom_call.1} parent=11 // pred_region
          _
        $region36: #{tpu_custom_call.1} parent=11 // pred_fallthru
          _
      $region12: #{tpu_custom_call.1} parent=5 // pred_fallthru
        _
      %p276 = scmp.lt.s32.totalorder %s21, 2
      // Predicated region
      $region37: #{tpu_custom_call.1} parent=5 // pred_check
        %p277 = pneg %p276
      $region38: #{tpu_custom_call.1} parent=5 // pred_check_branch
        %279 = sbr.rel (%p277) target = $region40
      $region39: #{tpu_custom_call.1} parent=5 // pred_region
        // Predicated region
        $region41: #{tpu_custom_call.1} parent=39 // pred_check
          %p280 = pneg %p53
        $region42: #{tpu_custom_call.1} parent=39 // pred_check_branch
          %282 = sbr.rel (%p280) target = $region44
        $region43: #{tpu_custom_call.1} parent=39 // pred_region
          %s283 = sand.u32 %s43, 1
          %s284 = scalar_lea.sflag [#allocation3], %s283
          %s285 = sand.u32 %s43, 1
          %s286 = smul.addr %s285, 24
          %s287 = scalar_lea.vmem [#allocation2], %s286
          %s289 = ssub.s32 384, 384
          %290 = vsyncadd %s284, %s289
          %s291 = smul.addr %s28, 3
          %s292 = smul.addr %s291, 128
          %s293 = scalar_lea.hbm %s0, %s292
          %s294 = sshll.u32 %s287, 4
          %s295 = int_to_ptr.vmem [resolvable:$true] %s294
          %300 = dma.hbm_to_vmem [thread:$0]  %s293, 384, %s295, %s284, 128, 128, 8
        $region44: #{tpu_custom_call.1} parent=39 // pred_fallthru
          _
      $region40: #{tpu_custom_call.1} parent=5 // pred_fallthru
        _
      %p301 = scmp.le.s32.totalorder 1, %s21
      %p302 = scmp.lt.s32.totalorder %s21, 3
      %p303 = pnand %p301, %p302
      %p304 = pneg %p303
      // Predicated region
      $region45: #{tpu_custom_call.1} parent=5 // pred_check
        _
      $region46: #{tpu_custom_call.1} parent=5 // pred_check_branch
        %306 = sbr.rel (%p303) target = $region48
      $region47: #{tpu_custom_call.1} parent=5 // pred_region
        %s307 = ssub.s32 %s21, 1
        %s308 = sand.u32 %s46, 1
        %s309 = scalar_lea.sflag [#allocation3], %s308
        %s310 = sand.u32 %s46, 1
        %s311 = smul.addr %s310, 24
        %s312 = scalar_lea.vmem [#allocation2], %s311
        // Predicated region
        $region49: #{tpu_custom_call.1} parent=47 // pred_check
          %p313 = pneg %p59
        $region50: #{tpu_custom_call.1} parent=47 // pred_check_branch
          %315 = sbr.rel (%p313) target = $region52
        $region51: #{tpu_custom_call.1} parent=47 // pred_region
          %316 = dma.done %s309, 384
        $region52: #{tpu_custom_call.1} parent=47 // pred_fallthru
          _
        // Predicated region
        $region53: #{tpu_custom_call.1} parent=47 // pred_check
          %p317 = pneg %p80
        $region54: #{tpu_custom_call.1} parent=47 // pred_check_branch
          %319 = sbr.rel (%p317) target = $region56
        $region55: #{tpu_custom_call.1} parent=47 // pred_region
          %320 = dma.done [#allocation6], 12288
        $region56: #{tpu_custom_call.1} parent=47 // pred_fallthru
          _
        // Predicated region
        $region57: #{tpu_custom_call.1} parent=47 // pred_check
          %p321 = pneg %p122
        $region58: #{tpu_custom_call.1} parent=47 // pred_check_branch
          %323 = sbr.rel (%p321) target = $region60
        $region59: #{tpu_custom_call.1} parent=47 // pred_region
          %324 = dma.done [#allocation6], 6144
        $region60: #{tpu_custom_call.1} parent=47 // pred_fallthru
          _
        // Predicated region
        $region61: #{tpu_custom_call.1} parent=47 // pred_check
          %p325 = pneg %p164
        $region62: #{tpu_custom_call.1} parent=47 // pred_check_branch
          %327 = sbr.rel (%p325) target = $region64
        $region63: #{tpu_custom_call.1} parent=47 // pred_region
          %328 = dma.done [#allocation9], 2048
        $region64: #{tpu_custom_call.1} parent=47 // pred_fallthru
          _
        %s329 = sand.u32 %s46, 1
        %s330 = scalar_lea.sflag [#allocation3], %s329
        %s331 = sand.u32 %s46, 1
        %s332 = smul.addr %s331, 24
        %s333 = scalar_lea.vmem [#allocation2], %s332
        %p334 = pneg %p59
        %p335 = pneg %p56
        %p336 = pneg %p80
        %p337 = pneg %p77
        %p338 = pneg %p101
        %p339 = pneg %p98
        %p340 = pneg %p122
        %p341 = pneg %p119
        %p342 = pneg %p143
        %p343 = pneg %p140
        %p344 = pneg %p164
        %p345 = pneg %p161
        %p346 = pneg %p185
        %p347 = pneg %p182
        %p348 = pneg %p213
        %p349 = pneg %p210
        %s350 = sand.u32 %s200, 1
        %s351 = scalar_lea.sflag [#allocation4], %s350
        %s352 = sand.u32 %s200, 1
        %s353 = smul.addr %s352, 16
        %s354 = scalar_lea.vmem [#allocation10], %s353
        %s355 = smul.u32 2, %s31
        %s356 = smul.u32 %s31, 16
        %s357 = scalar_lea.vmem %s312, %s356 [#allocation2]
        %v358 = vld [vmem:[%s357] sm:$0xff]
        %v359 = vld [vmem:[%s357 + $0x8] sm:$0xff]
        %v360 = vld [vmem:[%s357 + $0x10] sm:$0xf]
        %v361 = vld [vmem:[#allocation5] sm:$0xff]
        %v362 = vld [vmem:[#allocation5 + $0x8] sm:$0xff]
        %v363 = vld [vmem:[#allocation5 + $0x10] sm:$0xff]
        %v364 = vld [vmem:[#allocation5 + $0x18] sm:$0xff]
        %v365 = vld [vmem:[#allocation5 + $0x20] sm:$0xff]
        %v366 = vld [vmem:[#allocation5 + $0x28] sm:$0xff]
        %v367 = vld [vmem:[#allocation5 + $0x30] sm:$0xff]
        %v368 = vld [vmem:[#allocation5 + $0x38] sm:$0xff]
        %v369 = vld [vmem:[#allocation5 + $0x40] sm:$0xff]
        %v370 = vld [vmem:[#allocation5 + $0x48] sm:$0xff]
        %v371 = vld [vmem:[#allocation5 + $0x50] sm:$0xff]
        %v372 = vld [vmem:[#allocation5 + $0x58] sm:$0xff]
        %v373 = vld [vmem:[#allocation5 + $0x60] sm:$0xff]
        %v374 = vld [vmem:[#allocation5 + $0x68] sm:$0xff]
        %v375 = vld [vmem:[#allocation5 + $0x70] sm:$0xff]
        %v376 = vld [vmem:[#allocation5 + $0x78] sm:$0xff]
        %v377 = vld [vmem:[#allocation5 + $0x80] sm:$0xff]
        %v378 = vld [vmem:[#allocation5 + $0x88] sm:$0xff]
        %v379 = vld [vmem:[#allocation5 + $0x90] sm:$0xff]
        %v380 = vld [vmem:[#allocation5 + $0x98] sm:$0xff]
        %v381 = vld [vmem:[#allocation5 + $0xa0] sm:$0xff]
        %v382 = vld [vmem:[#allocation5 + $0xa8] sm:$0xff]
        %v383 = vld [vmem:[#allocation5 + $0xb0] sm:$0xff]
        %v384 = vld [vmem:[#allocation5 + $0xb8] sm:$0xff]
        %v385 = vld [vmem:[#allocation5 + $0xc0] sm:$0xff]
        %v386 = vld [vmem:[#allocation5 + $0xc8] sm:$0xff]
        %v387 = vld [vmem:[#allocation5 + $0xd0] sm:$0xff]
        %v388 = vld [vmem:[#allocation5 + $0xd8] sm:$0xff]
        %v389 = vld [vmem:[#allocation5 + $0xe0] sm:$0xff]
        %v390 = vld [vmem:[#allocation5 + $0xe8] sm:$0xff]
        %v391 = vld [vmem:[#allocation5 + $0xf0] sm:$0xff]
        %v392 = vld [vmem:[#allocation5 + $0xf8] sm:$0xff]
        %s393 = sadd.s32 %s356, 2
        %s394 = scalar_lea.vmem %s312, %s393 [#allocation2]
        %v395 = vld [vmem:[%s394] sm:$0xff]
        %v396 = vld [vmem:[%s394 + $0x8] sm:$0xff]
        %v397 = vld [vmem:[%s394 + $0x10] sm:$0xf]
        %s398 = scalar_lea.vmem [#allocation5], 256
        %v399 = vld [vmem:[%s398] sm:$0xff]
        %v400 = vld [vmem:[%s398 + $0x8] sm:$0xff]
        %v401 = vld [vmem:[%s398 + $0x10] sm:$0xff]
        %v402 = vld [vmem:[%s398 + $0x18] sm:$0xff]
        %v403 = vld [vmem:[%s398 + $0x20] sm:$0xff]
        %v404 = vld [vmem:[%s398 + $0x28] sm:$0xff]
        %v405 = vld [vmem:[%s398 + $0x30] sm:$0xff]
        %v406 = vld [vmem:[%s398 + $0x38] sm:$0xff]
        %v407 = vld [vmem:[%s398 + $0x40] sm:$0xff]
        %v408 = vld [vmem:[%s398 + $0x48] sm:$0xff]
        %v409 = vld [vmem:[%s398 + $0x50] sm:$0xff]
        %v410 = vld [vmem:[%s398 + $0x58] sm:$0xff]
        %v411 = vld [vmem:[%s398 + $0x60] sm:$0xff]
        %v412 = vld [vmem:[%s398 + $0x68] sm:$0xff]
        %v413 = vld [vmem:[%s398 + $0x70] sm:$0xff]
        %v414 = vld [vmem:[%s398 + $0x78] sm:$0xff]
        %v415 = vld [vmem:[%s398 + $0x80] sm:$0xff]
        %v416 = vld [vmem:[%s398 + $0x88] sm:$0xff]
        %v417 = vld [vmem:[%s398 + $0x90] sm:$0xff]
        %v418 = vld [vmem:[%s398 + $0x98] sm:$0xff]
        %v419 = vld [vmem:[%s398 + $0xa0] sm:$0xff]
        %v420 = vld [vmem:[%s398 + $0xa8] sm:$0xff]
        %v421 = vld [vmem:[%s398 + $0xb0] sm:$0xff]
        %v422 = vld [vmem:[%s398 + $0xb8] sm:$0xff]
        %v423 = vld [vmem:[%s398 + $0xc0] sm:$0xff]
        %v424 = vld [vmem:[%s398 + $0xc8] sm:$0xff]
        %v425 = vld [vmem:[%s398 + $0xd0] sm:$0xff]
        %v426 = vld [vmem:[%s398 + $0xd8] sm:$0xff]
        %v427 = vld [vmem:[%s398 + $0xe0] sm:$0xff]
        %v428 = vld [vmem:[%s398 + $0xe8] sm:$0xff]
        %v429 = vld [vmem:[%s398 + $0xf0] sm:$0xff]
        %v430 = vld [vmem:[%s398 + $0xf8] sm:$0xff]
        %431 = vmatprep.subr.mxu0 %v430
        %432 = vmatpush1.msra.mxu0 %v429
        %433 = vmatprep.subr.mxu0 %v428
        %434 = vmatpush1.msra.mxu0 %v427
        %435 = vmatprep.subr.mxu0 %v426
        %436 = vmatpush1.msra.mxu0 %v425
        %437 = vmatprep.subr.mxu0 %v424
        %438 = vmatpush1.msra.mxu0 %v423
        %439 = vmatprep.subr.mxu0 %v422
        %440 = vmatpush1.msra.mxu0 %v421
        %441 = vmatprep.subr.mxu0 %v420
        %442 = vmatpush1.msra.mxu0 %v419
        %443 = vmatprep.subr.mxu0 %v418
        %444 = vmatpush1.msra.mxu0 %v417
        %445 = vmatprep.subr.mxu0 %v416
        %446 = vmatpush1.msra.mxu0 %v415
        %447 = vmatprep.subr.mxu0 %v414
        %448 = vmatpush1.msra.mxu0 %v413
        %449 = vmatprep.subr.mxu0 %v412
        %450 = vmatpush1.msra.mxu0 %v411
        %451 = vmatprep.subr.mxu0 %v410
        %452 = vmatpush1.msra.mxu0 %v409
        %453 = vmatprep.subr.mxu0 %v408
        %454 = vmatpush1.msra.mxu0 %v407
        %455 = vmatprep.subr.mxu0 %v406
        %456 = vmatpush1.msra.mxu0 %v405
        %457 = vmatprep.subr.mxu0 %v404
        %458 = vmatpush1.msra.mxu0 %v403
        %459 = vmatprep.subr.mxu0 %v402
        %460 = vmatpush1.msra.mxu0 %v401
        %461 = vmatprep.subr.mxu0 %v400
        %462 = vmatpush1.msra.mxu0 %v399
        %463 = vmatprep.subr.mxu0 0.0
        %464 = vmatpush2.msra.mxu0 0.0
        %465 = vmatprep.subr.mxu0 0.0
        %466 = vmatpush2.msra.mxu0 0.0
        %467 = vmatprep.subr.mxu0 0.0
        %468 = vmatpush2.msra.mxu0 0.0
        %469 = vmatprep.subr.mxu0 0.0
        %470 = vmatpush2.msra.mxu0 0.0
        %471 = vmatprep.subr.mxu0 0.0
        %472 = vmatpush2.msra.mxu0 0.0
        %473 = vmatprep.subr.mxu0 0.0
        %474 = vmatpush2.msra.mxu0 0.0
        %475 = vmatprep.subr.mxu0 0.0
        %476 = vmatpush2.msra.mxu0 0.0
        %477 = vmatprep.subr.mxu0 0.0
        %478 = vmatpush2.msra.mxu0 0.0
        %479 = vmatprep.subr.mxu0 0.0
        %480 = vmatpush2.msra.mxu0 0.0
        %481 = vmatprep.subr.mxu0 0.0
        %482 = vmatpush2.msra.mxu0 0.0
        %483 = vmatprep.subr.mxu0 0.0
        %484 = vmatpush2.msra.mxu0 0.0
        %485 = vmatprep.subr.mxu0 0.0
        %486 = vmatpush2.msra.mxu0 0.0
        %487 = vmatprep.subr.mxu0 0.0
        %488 = vmatpush2.msra.mxu0 0.0
        %489 = vmatprep.subr.mxu0 0.0
        %490 = vmatpush2.msra.mxu0 0.0
        %491 = vmatprep.subr.mxu0 0.0
        %492 = vmatpush2.msra.mxu0 0.0
        %493 = vmatprep.subr.mxu0 0.0
        %494 = vmatpush2.msra.mxu0 0.0
        %495 = vmatprep.mubr.f32.mxu0 0.0
        %496 = vmatmul.mubr.f32.gmra.mxu0 %v395
        %v497 = vpop.f32.mrf.mxu0
        %v498 = vadd.f32 0.0, %v497
        %v499 = vpop.f32.mrf.mxu0
        %v500 = vadd.f32 0.0, %v499
        %501 = vmatprep.mubr.f32.mxu0 0.0
        %502 = vmatmul.mubr.f32.gmra.mxu0 %v396
        %v503 = vpop.f32.mrf.mxu0
        %v504 = vadd.f32 0.0, %v503
        %v505 = vpop.f32.mrf.mxu0
        %v506 = vadd.f32 0.0, %v505
        %507 = vmatprep.mubr.f32.mxu0 0.0
        %508 = vmatmul.mubr.f32.gmra.mxu0 %v397
        %v509 = vpop.f32.mrf.mxu0
        %v510 = vadd.f32 0.0, %v509
        %v511 = vpop.f32.mrf.mxu0
        %v512 = vadd.f32 0.0, %v511
        %513 = vdwg.mxu0
        %514 = vmatprep.subr.mxu0 %v392
        %515 = vmatpush1.msra.mxu0 %v391
        %516 = vmatprep.subr.mxu0 %v390
        %517 = vmatpush1.msra.mxu0 %v389
        %518 = vmatprep.subr.mxu0 %v388
        %519 = vmatpush1.msra.mxu0 %v387
        %520 = vmatprep.subr.mxu0 %v386
        %521 = vmatpush1.msra.mxu0 %v385
        %522 = vmatprep.subr.mxu0 %v384
        %523 = vmatpush1.msra.mxu0 %v383
        %524 = vmatprep.subr.mxu0 %v382
        %525 = vmatpush1.msra.mxu0 %v381
        %526 = vmatprep.subr.mxu0 %v380
        %527 = vmatpush1.msra.mxu0 %v379
        %528 = vmatprep.subr.mxu0 %v378
        %529 = vmatpush1.msra.mxu0 %v377
        %530 = vmatprep.subr.mxu0 %v376
        %531 = vmatpush1.msra.mxu0 %v375
        %532 = vmatprep.subr.mxu0 %v374
        %533 = vmatpush1.msra.mxu0 %v373
        %534 = vmatprep.subr.mxu0 %v372
        %535 = vmatpush1.msra.mxu0 %v371
        %536 = vmatprep.subr.mxu0 %v370
        %537 = vmatpush1.msra.mxu0 %v369
        %538 = vmatprep.subr.mxu0 %v368
        %539 = vmatpush1.msra.mxu0 %v367
        %540 = vmatprep.subr.mxu0 %v366
        %541 = vmatpush1.msra.mxu0 %v365
        %542 = vmatprep.subr.mxu0 %v364
        %543 = vmatpush1.msra.mxu0 %v363
        %544 = vmatprep.subr.mxu0 %v362
        %545 = vmatpush1.msra.mxu0 %v361
        %546 = vmatprep.subr.mxu0 0.0
        %547 = vmatpush2.msra.mxu0 0.0
        %548 = vmatprep.subr.mxu0 0.0
        %549 = vmatpush2.msra.mxu0 0.0
        %550 = vmatprep.subr.mxu0 0.0
        %551 = vmatpush2.msra.mxu0 0.0
        %552 = vmatprep.subr.mxu0 0.0
        %553 = vmatpush2.msra.mxu0 0.0
        %554 = vmatprep.subr.mxu0 0.0
        %555 = vmatpush2.msra.mxu0 0.0
        %556 = vmatprep.subr.mxu0 0.0
        %557 = vmatpush2.msra.mxu0 0.0
        %558 = vmatprep.subr.mxu0 0.0
        %559 = vmatpush2.msra.mxu0 0.0
        %560 = vmatprep.subr.mxu0 0.0
        %561 = vmatpush2.msra.mxu0 0.0
        %562 = vmatprep.subr.mxu0 0.0
        %563 = vmatpush2.msra.mxu0 0.0
        %564 = vmatprep.subr.mxu0 0.0
        %565 = vmatpush2.msra.mxu0 0.0
        %566 = vmatprep.subr.mxu0 0.0
        %567 = vmatpush2.msra.mxu0 0.0
        %568 = vmatprep.subr.mxu0 0.0
        %569 = vmatpush2.msra.mxu0 0.0
        %570 = vmatprep.subr.mxu0 0.0
        %571 = vmatpush2.msra.mxu0 0.0
        %572 = vmatprep.subr.mxu0 0.0
        %573 = vmatpush2.msra.mxu0 0.0
        %574 = vmatprep.subr.mxu0 0.0
        %575 = vmatpush2.msra.mxu0 0.0
        %576 = vmatprep.subr.mxu0 0.0
        %577 = vmatpush2.msra.mxu0 0.0
        %578 = vmatprep.mubr.f32.mxu0 0.0
        %579 = vmatmul.mubr.f32.gmra.mxu0 %v358
        %v580 = vpop.f32.mrf.mxu0
        %v581 = vadd.f32 %v498, %v580
        %v582 = vpop.f32.mrf.mxu0
        %v583 = vadd.f32 %v500, %v582
        %584 = vmatprep.mubr.f32.mxu0 0.0
        %585 = vmatmul.mubr.f32.gmra.mxu0 %v359
        %v586 = vpop.f32.mrf.mxu0
        %v587 = vadd.f32 %v504, %v586
        %v588 = vpop.f32.mrf.mxu0
        %v589 = vadd.f32 %v506, %v588
        %590 = vmatprep.mubr.f32.mxu0 0.0
        %591 = vmatmul.mubr.f32.gmra.mxu0 %v360
        %v592 = vpop.f32.mrf.mxu0
        %v593 = vadd.f32 %v510, %v592
        %v594 = vpop.f32.mrf.mxu0
        %v595 = vadd.f32 %v512, %v594
        %596 = vdwg.mxu0
        %s597 = sadd.s32 %s356, 4
        %s598 = scalar_lea.vmem %s312, %s597 [#allocation2]
        %v599 = vld [vmem:[%s598] sm:$0xff]
        %v600 = vld [vmem:[%s598 + $0x8] sm:$0xff]
        %v601 = vld [vmem:[%s598 + $0x10] sm:$0xf]
        %s602 = scalar_lea.vmem [#allocation5], 512
        %v603 = vld [vmem:[%s602] sm:$0xff]
        %v604 = vld [vmem:[%s602 + $0x8] sm:$0xff]
        %v605 = vld [vmem:[%s602 + $0x10] sm:$0xff]
        %v606 = vld [vmem:[%s602 + $0x18] sm:$0xff]
        %v607 = vld [vmem:[%s602 + $0x20] sm:$0xff]
        %v608 = vld [vmem:[%s602 + $0x28] sm:$0xff]
        %v609 = vld [vmem:[%s602 + $0x30] sm:$0xff]
        %v610 = vld [vmem:[%s602 + $0x38] sm:$0xff]
        %v611 = vld [vmem:[%s602 + $0x40] sm:$0xff]
        %v612 = vld [vmem:[%s602 + $0x48] sm:$0xff]
        %v613 = vld [vmem:[%s602 + $0x50] sm:$0xff]
        %v614 = vld [vmem:[%s602 + $0x58] sm:$0xff]
        %v615 = vld [vmem:[%s602 + $0x60] sm:$0xff]
        %v616 = vld [vmem:[%s602 + $0x68] sm:$0xff]
        %v617 = vld [vmem:[%s602 + $0x70] sm:$0xff]
        %v618 = vld [vmem:[%s602 + $0x78] sm:$0xff]
        %v619 = vld [vmem:[%s602 + $0x80] sm:$0xff]
        %v620 = vld [vmem:[%s602 + $0x88] sm:$0xff]
        %v621 = vld [vmem:[%s602 + $0x90] sm:$0xff]
        %v622 = vld [vmem:[%s602 + $0x98] sm:$0xff]
        %v623 = vld [vmem:[%s602 + $0xa0] sm:$0xff]
        %v624 = vld [vmem:[%s602 + $0xa8] sm:$0xff]
        %v625 = vld [vmem:[%s602 + $0xb0] sm:$0xff]
        %v626 = vld [vmem:[%s602 + $0xb8] sm:$0xff]
        %v627 = vld [vmem:[%s602 + $0xc0] sm:$0xff]
        %v628 = vld [vmem:[%s602 + $0xc8] sm:$0xff]
        %v629 = vld [vmem:[%s602 + $0xd0] sm:$0xff]
        %v630 = vld [vmem:[%s602 + $0xd8] sm:$0xff]
        %v631 = vld [vmem:[%s602 + $0xe0] sm:$0xff]
        %v632 = vld [vmem:[%s602 + $0xe8] sm:$0xff]
        %v633 = vld [vmem:[%s602 + $0xf0] sm:$0xff]
        %v634 = vld [vmem:[%s602 + $0xf8] sm:$0xff]
        %635 = vmatprep.subr.mxu0 %v634
        %636 = vmatpush1.msra.mxu0 %v633
        %637 = vmatprep.subr.mxu0 %v632
        %638 = vmatpush1.msra.mxu0 %v631
        %639 = vmatprep.subr.mxu0 %v630
        %640 = vmatpush1.msra.mxu0 %v629
        %641 = vmatprep.subr.mxu0 %v628
        %642 = vmatpush1.msra.mxu0 %v627
        %643 = vmatprep.subr.mxu0 %v626
        %644 = vmatpush1.msra.mxu0 %v625
        %645 = vmatprep.subr.mxu0 %v624
        %646 = vmatpush1.msra.mxu0 %v623
        %647 = vmatprep.subr.mxu0 %v622
        %648 = vmatpush1.msra.mxu0 %v621
        %649 = vmatprep.subr.mxu0 %v620
        %650 = vmatpush1.msra.mxu0 %v619
        %651 = vmatprep.subr.mxu0 %v618
        %652 = vmatpush1.msra.mxu0 %v617
        %653 = vmatprep.subr.mxu0 %v616
        %654 = vmatpush1.msra.mxu0 %v615
        %655 = vmatprep.subr.mxu0 %v614
        %656 = vmatpush1.msra.mxu0 %v613
        %657 = vmatprep.subr.mxu0 %v612
        %658 = vmatpush1.msra.mxu0 %v611
        %659 = vmatprep.subr.mxu0 %v610
        %660 = vmatpush1.msra.mxu0 %v609
        %661 = vmatprep.subr.mxu0 %v608
        %662 = vmatpush1.msra.mxu0 %v607
        %663 = vmatprep.subr.mxu0 %v606
        %664 = vmatpush1.msra.mxu0 %v605
        %665 = vmatprep.subr.mxu0 %v604
        %666 = vmatpush1.msra.mxu0 %v603
        %667 = vmatprep.subr.mxu0 0.0
        %668 = vmatpush2.msra.mxu0 0.0
        %669 = vmatprep.subr.mxu0 0.0
        %670 = vmatpush2.msra.mxu0 0.0
        %671 = vmatprep.subr.mxu0 0.0
        %672 = vmatpush2.msra.mxu0 0.0
        %673 = vmatprep.subr.mxu0 0.0
        %674 = vmatpush2.msra.mxu0 0.0
        %675 = vmatprep.subr.mxu0 0.0
        %676 = vmatpush2.msra.mxu0 0.0
        %677 = vmatprep.subr.mxu0 0.0
        %678 = vmatpush2.msra.mxu0 0.0
        %679 = vmatprep.subr.mxu0 0.0
        %680 = vmatpush2.msra.mxu0 0.0
        %681 = vmatprep.subr.mxu0 0.0
        %682 = vmatpush2.msra.mxu0 0.0
        %683 = vmatprep.subr.mxu0 0.0
        %684 = vmatpush2.msra.mxu0 0.0
        %685 = vmatprep.subr.mxu0 0.0
        %686 = vmatpush2.msra.mxu0 0.0
        %687 = vmatprep.subr.mxu0 0.0
        %688 = vmatpush2.msra.mxu0 0.0
        %689 = vmatprep.subr.mxu0 0.0
        %690 = vmatpush2.msra.mxu0 0.0
        %691 = vmatprep.subr.mxu0 0.0
        %692 = vmatpush2.msra.mxu0 0.0
        %693 = vmatprep.subr.mxu0 0.0
        %694 = vmatpush2.msra.mxu0 0.0
        %695 = vmatprep.subr.mxu0 0.0
        %696 = vmatpush2.msra.mxu0 0.0
        %697 = vmatprep.subr.mxu0 0.0
        %698 = vmatpush2.msra.mxu0 0.0
        %699 = vmatprep.mubr.f32.mxu0 0.0
        %700 = vmatmul.mubr.f32.gmra.mxu0 %v599
        %v701 = vpop.f32.mrf.mxu0
        %v702 = vadd.f32 0.0, %v701
        %v703 = vpop.f32.mrf.mxu0
        %v704 = vadd.f32 0.0, %v703
        %705 = vmatprep.mubr.f32.mxu0 0.0
        %706 = vmatmul.mubr.f32.gmra.mxu0 %v600
        %v707 = vpop.f32.mrf.mxu0
        %v708 = vadd.f32 0.0, %v707
        %v709 = vpop.f32.mrf.mxu0
        %v710 = vadd.f32 0.0, %v709
        %711 = vmatprep.mubr.f32.mxu0 0.0
        %712 = vmatmul.mubr.f32.gmra.mxu0 %v601
        %v713 = vpop.f32.mrf.mxu0
        %v714 = vadd.f32 0.0, %v713
        %v715 = vpop.f32.mrf.mxu0
        %v716 = vadd.f32 0.0, %v715
        %717 = vdwg.mxu0
        %v718 = vadd.f32 %v581, %v702
        %v719 = vadd.f32 %v583, %v704
        %v720 = vadd.f32 %v587, %v708
        %v721 = vadd.f32 %v589, %v710
        %v722 = vadd.f32 %v593, %v714
        %v723 = vadd.f32 %v595, %v716
        %v724 = vld [vmem:[%s6] sm:$0x1]
        %v726 = vlaneseq
        %v727 = vshrl.u32 %v726, 7
        %v728 = vsub.s32 0, %v727
        %v729 = vrot.slane %v724, %v728
        %v731 = vadd.f32 %v719, %v729
        %v732 = vadd.f32 %v721, %v729
        %v733 = vadd.f32 %v723, %v729
        %v734 = vld [vmem:[%s2] sm:$0x1]
        %v736 = vlaneseq
        %v737 = vshrl.u32 %v736, 7
        %v738 = vsub.s32 0, %v737
        %v739 = vrot.slane %v734, %v738
        %v741 = vadd.f32 %v718, %v739
        %v742 = vadd.f32 %v720, %v739
        %v743 = vadd.f32 %v722, %v739
        %v744 = vmax.f32 %v741, 0.0
        %v745 = vmax.f32 %v742, 0.0
        %v746 = vmax.f32 %v743, 0.0
        %v747 = vlaneseq
        %v748 = vshrl.u32 %v747, 7
        %v749 = vadd.s32 %v748, 8
        %v750 = vadd.s32 %v748, 16
        %s751 = ssub.s32 4, %s356
        %v752 = vstv %s751
        %vm753 = vcmp.ge.s32.totalorder %v748, %v752
        %vm754 = vcmp.ge.s32.totalorder %v749, %v752
        %vm755 = vcmp.ge.s32.totalorder %v750, %v752
        %v756 = vsel %vm753, 1, 0
        %v757 = vsel %vm754, 1, 0
        %v758 = vsel %vm755, 1, 0
        %vm759 = vcmp.eq.s32.totalorder %v756, 1
        %vm760 = vcmp.eq.s32.totalorder %v757, 1
        %vm761 = vcmp.eq.s32.totalorder %v758, 1
        %v762 = vsel %vm759, %v744, 0.0
        %v763 = vsel %vm760, %v745, 0.0
        %v764 = vsel %vm761, %v746, 0.0
        %v765 = vld [vmem:[#allocation7] sm:$0xff]
        %v766 = vld [vmem:[#allocation7 + $0x8] sm:$0xff]
        %v767 = vld [vmem:[#allocation7 + $0x10] sm:$0xff]
        %v768 = vld [vmem:[#allocation7 + $0x18] sm:$0xff]
        %v769 = vld [vmem:[#allocation7 + $0x20] sm:$0xff]
        %v770 = vld [vmem:[#allocation7 + $0x28] sm:$0xff]
        %v771 = vld [vmem:[#allocation7 + $0x30] sm:$0xff]
        %v772 = vld [vmem:[#allocation7 + $0x38] sm:$0xff]
        %v773 = vld [vmem:[#allocation7 + $0x40] sm:$0xff]
        %v774 = vld [vmem:[#allocation7 + $0x48] sm:$0xff]
        %v775 = vld [vmem:[#allocation7 + $0x50] sm:$0xff]
        %v776 = vld [vmem:[#allocation7 + $0x58] sm:$0xff]
        %v777 = vld [vmem:[#allocation7 + $0x60] sm:$0xff]
        %v778 = vld [vmem:[#allocation7 + $0x68] sm:$0xff]
        %v779 = vld [vmem:[#allocation7 + $0x70] sm:$0xff]
        %v780 = vld [vmem:[#allocation7 + $0x78] sm:$0xff]
        %s781 = scalar_lea.vmem [#allocation7], 128
        %v782 = vld [vmem:[%s781] sm:$0xff]
        %v783 = vld [vmem:[%s781 + $0x8] sm:$0xff]
        %v784 = vld [vmem:[%s781 + $0x10] sm:$0xff]
        %v785 = vld [vmem:[%s781 + $0x18] sm:$0xff]
        %v786 = vld [vmem:[%s781 + $0x20] sm:$0xff]
        %v787 = vld [vmem:[%s781 + $0x28] sm:$0xff]
        %v788 = vld [vmem:[%s781 + $0x30] sm:$0xff]
        %v789 = vld [vmem:[%s781 + $0x38] sm:$0xff]
        %v790 = vld [vmem:[%s781 + $0x40] sm:$0xff]
        %v791 = vld [vmem:[%s781 + $0x48] sm:$0xff]
        %v792 = vld [vmem:[%s781 + $0x50] sm:$0xff]
        %v793 = vld [vmem:[%s781 + $0x58] sm:$0xff]
        %v794 = vld [vmem:[%s781 + $0x60] sm:$0xff]
        %v795 = vld [vmem:[%s781 + $0x68] sm:$0xff]
        %v796 = vld [vmem:[%s781 + $0x70] sm:$0xff]
        %v797 = vld [vmem:[%s781 + $0x78] sm:$0xff]
        %vm801 = vcmask 1045504
        %v802 = vrot.slane %v762, 2
        %v803 = vrot.slane %v763, 2
        %v804 = vsel %vm801, %v802, %v803
        %v805 = vrot.slane %v764, 2
        %v806 = vsel %vm801, %v803, %v805
        %809 = vmatprep.subr.mxu0 0.0
        %810 = vmatpush1.msra.mxu0 %v797
        %811 = vmatprep.subr.mxu0 0.0
        %812 = vmatpush1.msra.mxu0 %v796
        %813 = vmatprep.subr.mxu0 0.0
        %814 = vmatpush1.msra.mxu0 %v795
        %815 = vmatprep.subr.mxu0 0.0
        %816 = vmatpush1.msra.mxu0 %v794
        %817 = vmatprep.subr.mxu0 0.0
        %818 = vmatpush1.msra.mxu0 %v793
        %819 = vmatprep.subr.mxu0 0.0
        %820 = vmatpush1.msra.mxu0 %v792
        %821 = vmatprep.subr.mxu0 0.0
        %822 = vmatpush1.msra.mxu0 %v791
        %823 = vmatprep.subr.mxu0 0.0
        %824 = vmatpush1.msra.mxu0 %v790
        %825 = vmatprep.subr.mxu0 0.0
        %826 = vmatpush1.msra.mxu0 %v789
        %827 = vmatprep.subr.mxu0 0.0
        %828 = vmatpush1.msra.mxu0 %v788
        %829 = vmatprep.subr.mxu0 0.0
        %830 = vmatpush1.msra.mxu0 %v787
        %831 = vmatprep.subr.mxu0 0.0
        %832 = vmatpush1.msra.mxu0 %v786
        %833 = vmatprep.subr.mxu0 0.0
        %834 = vmatpush1.msra.mxu0 %v785
        %835 = vmatprep.subr.mxu0 0.0
        %836 = vmatpush1.msra.mxu0 %v784
        %837 = vmatprep.subr.mxu0 0.0
        %838 = vmatpush1.msra.mxu0 %v783
        %839 = vmatprep.subr.mxu0 0.0
        %840 = vmatpush1.msra.mxu0 %v782
        %841 = vmatprep.subr.mxu0 0.0
        %842 = vmatpush2.msra.mxu0 0.0
        %843 = vmatprep.subr.mxu0 0.0
        %844 = vmatpush2.msra.mxu0 0.0
        %845 = vmatprep.subr.mxu0 0.0
        %846 = vmatpush2.msra.mxu0 0.0
        %847 = vmatprep.subr.mxu0 0.0
        %848 = vmatpush2.msra.mxu0 0.0
        %849 = vmatprep.subr.mxu0 0.0
        %850 = vmatpush2.msra.mxu0 0.0
        %851 = vmatprep.subr.mxu0 0.0
        %852 = vmatpush2.msra.mxu0 0.0
        %853 = vmatprep.subr.mxu0 0.0
        %854 = vmatpush2.msra.mxu0 0.0
        %855 = vmatprep.subr.mxu0 0.0
        %856 = vmatpush2.msra.mxu0 0.0
        %857 = vmatprep.subr.mxu0 0.0
        %858 = vmatpush2.msra.mxu0 0.0
        %859 = vmatprep.subr.mxu0 0.0
        %860 = vmatpush2.msra.mxu0 0.0
        %861 = vmatprep.subr.mxu0 0.0
        %862 = vmatpush2.msra.mxu0 0.0
        %863 = vmatprep.subr.mxu0 0.0
        %864 = vmatpush2.msra.mxu0 0.0
        %865 = vmatprep.subr.mxu0 0.0
        %866 = vmatpush2.msra.mxu0 0.0
        %867 = vmatprep.subr.mxu0 0.0
        %868 = vmatpush2.msra.mxu0 0.0
        %869 = vmatprep.subr.mxu0 0.0
        %870 = vmatpush2.msra.mxu0 0.0
        %871 = vmatprep.subr.mxu0 0.0
        %872 = vmatpush2.msra.mxu0 0.0
        %873 = vmatprep.mubr.f32.mxu0 0.0
        %874 = vmatmul.mubr.f32.gmra.mxu0 %v804
        %v875 = vpop.f32.mrf.mxu0
        %v876 = vadd.f32 0.0, %v875
        %v877 = vpop.f32.mrf.mxu0
        %878 = vmatprep.mubr.f32.mxu0 0.0
        %879 = vmatmul.mubr.f32.gmra.mxu0 %v806
        %v880 = vpop.f32.mrf.mxu0
        %v881 = vadd.f32 0.0, %v880
        %v882 = vpop.f32.mrf.mxu0
        %883 = vdwg.mxu0
        %884 = vmatprep.subr.mxu0 0.0
        %885 = vmatpush1.msra.mxu0 %v780
        %886 = vmatprep.subr.mxu0 0.0
        %887 = vmatpush1.msra.mxu0 %v779
        %888 = vmatprep.subr.mxu0 0.0
        %889 = vmatpush1.msra.mxu0 %v778
        %890 = vmatprep.subr.mxu0 0.0
        %891 = vmatpush1.msra.mxu0 %v777
        %892 = vmatprep.subr.mxu0 0.0
        %893 = vmatpush1.msra.mxu0 %v776
        %894 = vmatprep.subr.mxu0 0.0
        %895 = vmatpush1.msra.mxu0 %v775
        %896 = vmatprep.subr.mxu0 0.0
        %897 = vmatpush1.msra.mxu0 %v774
        %898 = vmatprep.subr.mxu0 0.0
        %899 = vmatpush1.msra.mxu0 %v773
        %900 = vmatprep.subr.mxu0 0.0
        %901 = vmatpush1.msra.mxu0 %v772
        %902 = vmatprep.subr.mxu0 0.0
        %903 = vmatpush1.msra.mxu0 %v771
        %904 = vmatprep.subr.mxu0 0.0
        %905 = vmatpush1.msra.mxu0 %v770
        %906 = vmatprep.subr.mxu0 0.0
        %907 = vmatpush1.msra.mxu0 %v769
        %908 = vmatprep.subr.mxu0 0.0
        %909 = vmatpush1.msra.mxu0 %v768
        %910 = vmatprep.subr.mxu0 0.0
        %911 = vmatpush1.msra.mxu0 %v767
        %912 = vmatprep.subr.mxu0 0.0
        %913 = vmatpush1.msra.mxu0 %v766
        %914 = vmatprep.subr.mxu0 0.0
        %915 = vmatpush1.msra.mxu0 %v765
        %916 = vmatprep.subr.mxu0 0.0
        %917 = vmatpush2.msra.mxu0 0.0
        %918 = vmatprep.subr.mxu0 0.0
        %919 = vmatpush2.msra.mxu0 0.0
        %920 = vmatprep.subr.mxu0 0.0
        %921 = vmatpush2.msra.mxu0 0.0
        %922 = vmatprep.subr.mxu0 0.0
        %923 = vmatpush2.msra.mxu0 0.0
        %924 = vmatprep.subr.mxu0 0.0
        %925 = vmatpush2.msra.mxu0 0.0
        %926 = vmatprep.subr.mxu0 0.0
        %927 = vmatpush2.msra.mxu0 0.0
        %928 = vmatprep.subr.mxu0 0.0
        %929 = vmatpush2.msra.mxu0 0.0
        %930 = vmatprep.subr.mxu0 0.0
        %931 = vmatpush2.msra.mxu0 0.0
        %932 = vmatprep.subr.mxu0 0.0
        %933 = vmatpush2.msra.mxu0 0.0
        %934 = vmatprep.subr.mxu0 0.0
        %935 = vmatpush2.msra.mxu0 0.0
        %936 = vmatprep.subr.mxu0 0.0
        %937 = vmatpush2.msra.mxu0 0.0
        %938 = vmatprep.subr.mxu0 0.0
        %939 = vmatpush2.msra.mxu0 0.0
        %940 = vmatprep.subr.mxu0 0.0
        %941 = vmatpush2.msra.mxu0 0.0
        %942 = vmatprep.subr.mxu0 0.0
        %943 = vmatpush2.msra.mxu0 0.0
        %944 = vmatprep.subr.mxu0 0.0
        %945 = vmatpush2.msra.mxu0 0.0
        %946 = vmatprep.subr.mxu0 0.0
        %947 = vmatpush2.msra.mxu0 0.0
        %948 = vmatprep.mubr.f32.mxu0 0.0
        %949 = vmatmul.mubr.f32.gmra.mxu0 %v762
        %v950 = vpop.f32.mrf.mxu0
        %v951 = vadd.f32 %v876, %v950
        %v952 = vpop.f32.mrf.mxu0
        %953 = vmatprep.mubr.f32.mxu0 0.0
        %954 = vmatmul.mubr.f32.gmra.mxu0 %v763
        %v955 = vpop.f32.mrf.mxu0
        %v956 = vadd.f32 %v881, %v955
        %v957 = vpop.f32.mrf.mxu0
        %958 = vdwg.mxu0
        %s959 = scalar_lea.vmem [#allocation7], 256
        %v960 = vld [vmem:[%s959] sm:$0xff]
        %v961 = vld [vmem:[%s959 + $0x8] sm:$0xff]
        %v962 = vld [vmem:[%s959 + $0x10] sm:$0xff]
        %v963 = vld [vmem:[%s959 + $0x18] sm:$0xff]
        %v964 = vld [vmem:[%s959 + $0x20] sm:$0xff]
        %v965 = vld [vmem:[%s959 + $0x28] sm:$0xff]
        %v966 = vld [vmem:[%s959 + $0x30] sm:$0xff]
        %v967 = vld [vmem:[%s959 + $0x38] sm:$0xff]
        %v968 = vld [vmem:[%s959 + $0x40] sm:$0xff]
        %v969 = vld [vmem:[%s959 + $0x48] sm:$0xff]
        %v970 = vld [vmem:[%s959 + $0x50] sm:$0xff]
        %v971 = vld [vmem:[%s959 + $0x58] sm:$0xff]
        %v972 = vld [vmem:[%s959 + $0x60] sm:$0xff]
        %v973 = vld [vmem:[%s959 + $0x68] sm:$0xff]
        %v974 = vld [vmem:[%s959 + $0x70] sm:$0xff]
        %v975 = vld [vmem:[%s959 + $0x78] sm:$0xff]
        %vm976 = vcmask 1043456
        %v977 = vrot.slane %v762, 4
        %v978 = vrot.slane %v763, 4
        %v979 = vsel %vm976, %v977, %v978
        %v980 = vrot.slane %v764, 4
        %v981 = vsel %vm976, %v978, %v980
        %984 = vmatprep.subr.mxu0 0.0
        %985 = vmatpush1.msra.mxu0 %v975
        %986 = vmatprep.subr.mxu0 0.0
        %987 = vmatpush1.msra.mxu0 %v974
        %988 = vmatprep.subr.mxu0 0.0
        %989 = vmatpush1.msra.mxu0 %v973
        %990 = vmatprep.subr.mxu0 0.0
        %991 = vmatpush1.msra.mxu0 %v972
        %992 = vmatprep.subr.mxu0 0.0
        %993 = vmatpush1.msra.mxu0 %v971
        %994 = vmatprep.subr.mxu0 0.0
        %995 = vmatpush1.msra.mxu0 %v970
        %996 = vmatprep.subr.mxu0 0.0
        %997 = vmatpush1.msra.mxu0 %v969
        %998 = vmatprep.subr.mxu0 0.0
        %999 = vmatpush1.msra.mxu0 %v968
        %1000 = vmatprep.subr.mxu0 0.0
        %1001 = vmatpush1.msra.mxu0 %v967
        %1002 = vmatprep.subr.mxu0 0.0
        %1003 = vmatpush1.msra.mxu0 %v966
        %1004 = vmatprep.subr.mxu0 0.0
        %1005 = vmatpush1.msra.mxu0 %v965
        %1006 = vmatprep.subr.mxu0 0.0
        %1007 = vmatpush1.msra.mxu0 %v964
        %1008 = vmatprep.subr.mxu0 0.0
        %1009 = vmatpush1.msra.mxu0 %v963
        %1010 = vmatprep.subr.mxu0 0.0
        %1011 = vmatpush1.msra.mxu0 %v962
        %1012 = vmatprep.subr.mxu0 0.0
        %1013 = vmatpush1.msra.mxu0 %v961
        %1014 = vmatprep.subr.mxu0 0.0
        %1015 = vmatpush1.msra.mxu0 %v960
        %1016 = vmatprep.subr.mxu0 0.0
        %1017 = vmatpush2.msra.mxu0 0.0
        %1018 = vmatprep.subr.mxu0 0.0
        %1019 = vmatpush2.msra.mxu0 0.0
        %1020 = vmatprep.subr.mxu0 0.0
        %1021 = vmatpush2.msra.mxu0 0.0
        %1022 = vmatprep.subr.mxu0 0.0
        %1023 = vmatpush2.msra.mxu0 0.0
        %1024 = vmatprep.subr.mxu0 0.0
        %1025 = vmatpush2.msra.mxu0 0.0
        %1026 = vmatprep.subr.mxu0 0.0
        %1027 = vmatpush2.msra.mxu0 0.0
        %1028 = vmatprep.subr.mxu0 0.0
        %1029 = vmatpush2.msra.mxu0 0.0
        %1030 = vmatprep.subr.mxu0 0.0
        %1031 = vmatpush2.msra.mxu0 0.0
        %1032 = vmatprep.subr.mxu0 0.0
        %1033 = vmatpush2.msra.mxu0 0.0
        %1034 = vmatprep.subr.mxu0 0.0
        %1035 = vmatpush2.msra.mxu0 0.0
        %1036 = vmatprep.subr.mxu0 0.0
        %1037 = vmatpush2.msra.mxu0 0.0
        %1038 = vmatprep.subr.mxu0 0.0
        %1039 = vmatpush2.msra.mxu0 0.0
        %1040 = vmatprep.subr.mxu0 0.0
        %1041 = vmatpush2.msra.mxu0 0.0
        %1042 = vmatprep.subr.mxu0 0.0
        %1043 = vmatpush2.msra.mxu0 0.0
        %1044 = vmatprep.subr.mxu0 0.0
        %1045 = vmatpush2.msra.mxu0 0.0
        %1046 = vmatprep.subr.mxu0 0.0
        %1047 = vmatpush2.msra.mxu0 0.0
        %1048 = vmatprep.mubr.f32.mxu0 0.0
        %1049 = vmatmul.mubr.f32.gmra.mxu0 %v979
        %v1050 = vpop.f32.mrf.mxu0
        %v1051 = vadd.f32 0.0, %v1050
        %v1052 = vpop.f32.mrf.mxu0
        %1053 = vmatprep.mubr.f32.mxu0 0.0
        %1054 = vmatmul.mubr.f32.gmra.mxu0 %v981
        %v1055 = vpop.f32.mrf.mxu0
        %v1056 = vadd.f32 0.0, %v1055
        %v1057 = vpop.f32.mrf.mxu0
        %1058 = vdwg.mxu0
        %v1059 = vadd.f32 %v951, %v1051
        %v1060 = vadd.f32 %v956, %v1056
        %v1061 = vld [vmem:[%s4] sm:$0x1]
        %v1063 = vlaneseq
        %v1064 = vshrl.u32 %v1063, 7
        %v1065 = vsub.s32 0, %v1064
        %v1066 = vrot.slane %v1061, %v1065
        %v1068 = vadd.f32 %v1059, %v1066
        %v1069 = vadd.f32 %v1060, %v1066
        %v1070 = vmax.f32 %v1068, 0.0
        %v1071 = vmax.f32 %v1069, 0.0
        %v1075 = vrot.slane %v731, 4
        %v1076 = vrot.slane %v732, 4
        %v1077 = vsel %vm976, %v1075, %v1076
        %v1078 = vrot.slane %v733, 4
        %v1079 = vsel %vm976, %v1076, %v1078
        %v1082 = vadd.f32 %v1070, %v1077
        %v1083 = vadd.f32 %v1071, %v1079
        %v1084 = vmax.f32 %v1082, 0.0
        %v1085 = vmax.f32 %v1083, 0.0
        %1086 = vst [vmem:[%s354] sm:$0xff] %v1084
        %1087 = vst [vmem:[%s354 + $0x8] sm:$0xff] %v1085
        %s1088 = sand.u32 %s200, 1
        %s1089 = scalar_lea.sflag [#allocation4], %s1088
        %s1090 = sand.u32 %s200, 1
        %s1091 = smul.addr %s1090, 16
        %s1092 = scalar_lea.vmem [#allocation10], %s1091
        // Predicated region
        $region65: #{tpu_custom_call.1} parent=47 // pred_check
          %p1093 = pneg %p210
        $region66: #{tpu_custom_call.1} parent=47 // pred_check_branch
          %1095 = sbr.rel (%p1093) target = $region68
        $region67: #{tpu_custom_call.1} parent=47 // pred_region
          %s1096 = smul.u32 2, %s31
          %s1098 = ssub.s32 256, 256
          %1099 = vsyncadd %s1089, %s1098
          %s1100 = smul.addr %s30, 2
          %s1101 = sadd.s32 %s1096, %s1100
          %s1102 = smul.addr %s1101, 128
          %s1103 = scalar_lea.hbm %s7, %s1102
          %s1104 = sshll.u32 %s1092, 4
          %s1105 = int_to_ptr.vmem [resolvable:$true] %s1104
          %1110 = dma.vmem_to_hbm [thread:$0]  %s1105, 256, %s1103, %s1089, 128, 128, 8
        $region68: #{tpu_custom_call.1} parent=47 // pred_fallthru
          _
      $region48: #{tpu_custom_call.1} parent=5 // pred_fallthru
        _
      %p1111 = scmp.le.s32.totalorder 2, %s21
      // Predicated region
      $region69: #{tpu_custom_call.1} parent=5 // pred_check
        %p1112 = pneg %p1111
      $region70: #{tpu_custom_call.1} parent=5 // pred_check_branch
        %1114 = sbr.rel (%p1112) target = $region72
      $region71: #{tpu_custom_call.1} parent=5 // pred_region
        %s1115 = ssub.s32 %s21, 2
        // Predicated region
        $region73: #{tpu_custom_call.1} parent=71 // pred_check
          %p1116 = pneg %p216
        $region74: #{tpu_custom_call.1} parent=71 // pred_check_branch
          %1118 = sbr.rel (%p1116) target = $region76
        $region75: #{tpu_custom_call.1} parent=71 // pred_region
          %s1119 = sand.u32 %s201, 1
          %s1120 = scalar_lea.sflag [#allocation4], %s1119
          %s1121 = sand.u32 %s201, 1
          %s1122 = smul.addr %s1121, 16
          %s1123 = scalar_lea.vmem [#allocation10], %s1122
          %1124 = dma.done %s1120, 256
        $region76: #{tpu_custom_call.1} parent=71 // pred_fallthru
          _
      $region72: #{tpu_custom_call.1} parent=5 // pred_fallthru
        _
    $region6: #{tpu_custom_call.1} parent=1 // loop_footer
      %s25 = sadd.s32 1, %s21
    $region7: #{tpu_custom_call.1} parent=1 // loop_footer_branch
      %20 = sbr.rel target = $region3
    $region8: #{tpu_custom_call.1} parent=1 // loop_exit
      _
    %1125 = vsyncpa [#allocation3], 1
    %s1126 = scalar_lea.sflag [#allocation3], 1
    %1127 = vsyncpa %s1126, 1
    %1128 = vsyncpa [#allocation6], 1
    %1129 = vsyncpa [#allocation9], 1
    %1130 = vsyncpa [#allocation4], 1
    %s1131 = scalar_lea.sflag [#allocation4], 1
    %1132 = vsyncpa %s1131, 1

</llo_original>
